<compile_context>
chip_gen: v7x
topology: tpu7x:2x2x1
jax: 0.10.0
libtpu: 0.0.40
codegen_flags: <defaults>
</compile_context>

<pallas_src>
import jax
import jax.numpy as jnp
from jax.experimental import pallas as pl
from jax.experimental.pallas import tpu as pltpu


# ----------------------------------------------------------------------------
# Fused kernel: (1x1x1 conv + folded BN + folded 1/8) -> PReLU -> 2x2x2 sum-pool
# ----------------------------------------------------------------------------
def _fused_conv_bn_prelu_pool_kernel(x_ref, w_ref, b_ref, alpha_ref, o_ref):
    """x_ref:     (8*Cin, TP)  packed tile: row = pool_offset*Cin + channel, lane = pooled pixel
       w_ref:     (Cout, Cin)  BN-folded 1x1x1 conv weight, pre-scaled by 1/8 (pool mean)
       b_ref:     (Cout, 1)    BN-folded bias, pre-scaled by 1/8
       alpha_ref: (1,) SMEM    PReLU slope (scalar)
       o_ref:     (Cout, TP)   pooled output tile (pooled pixels on lanes)
    """
    w = w_ref[...]                       # (Cout, Cin) — tiny, one vreg
    b = b_ref[...]                       # (Cout, 1)
    alpha = alpha_ref[0]                 # scalar from SMEM (sreg splat)
    cout, cin = w.shape
    n_off = x_ref.shape[0] // cin        # 8 pool-window offsets

    b_full = jnp.broadcast_to(b, o_ref.shape)   # hoisted once, reused for all offsets

    acc = None
    for k in range(n_off):               # static unroll over 2x2x2 pooling offsets
        y = b_full
        for c in range(cin):             # VPU broadcast-FMA conv (K=4: keep off the MXU)
            row = x_ref[pl.ds(k * cin + c, 1), :]     # (1, TP)
            y = y + w[:, c:c + 1] * row               # (Cout,1)*(1,TP) -> (Cout,TP)
        y = jnp.where(y >= 0.0, y, alpha * y)         # PReLU (VPU)
        acc = y if acc is None else acc + y           # sum over pool window (mean folded in)
    o_ref[...] = acc.astype(o_ref.dtype)


def _pick_tile(p):
    """Largest lane-dense tile (multiple of 128) dividing p.
    Per-step double-buffered footprint ≈ 2*(32 + Cout)*TP*4 B ≈ 10 MiB at TP=32768,
    which fits the default scoped VMEM on v5e/v6e/v7x. No forced minimum step count."""
    for t in (32768, 16384, 8192, 4096, 2048, 1024, 512, 256, 128):
        if p % t == 0:
            return t
    return p   # not 128-divisible: single full-extent block (always a legal BlockSpec)


# ----------------------------------------------------------------------------
# Public wrapper (BN fold + layout glue; no post-kernel transpose)
# ----------------------------------------------------------------------------
def covolution_with_pooling(x, params):
    """x: (N, Cin, D, H, W) float32 NCDHW -> (N, Cout, D//2, H//2, W//2) (eval-mode module)."""
    N, Cin, D, H, W = x.shape
    if W % 2 == 1:
        # TODO(synk): odd-W ConstantPad3d(1, 0) branch (zero-pad applied *after* activation,
        # zeros averaged into the pool with count_include_pad) is not implemented.
        raise NotImplementedError("odd last spatial dim (ConstantPad3d branch) not supported")

    # AvgPool3d(kernel=2, stride=2) floors odd D/H; cropping to even length is equivalent.
    De, He, We = (D // 2) * 2, (H // 2) * 2, (W // 2) * 2
    x = x[:, :, :De, :He, :We]
    D2, H2, W2 = De // 2, He // 2, We // 2
    Pn = D2 * H2 * W2

    conv_w = params["conv_w"]                      # (Cout, Cin)
    Cout = conv_w.shape[0]

    # Fold BatchNorm3d (eval, running stats) AND the 1/8 pool mean into the conv weight/bias.
    # PReLU is positively homogeneous: mean_k PReLU(W x_k + b) == sum_k PReLU((W/8) x_k + b/8).
    scale = params["bn_gamma"] * jax.lax.rsqrt(params["bn_var"] + params["bn_eps"])
    w_eff = (conv_w * scale[:, None]) * 0.125                                           # (Cout, Cin)
    b_eff = ((params["conv_b"] - params["bn_mean"]) * scale + params["bn_beta"]) * 0.125  # (Cout,)
    # TODO(synk): Dropout(p=0.1) is identity in eval mode; training-mode dropout not implemented.

    # Layout glue: pooled pixels -> lanes, (pool-offset, Cin) -> one dense 8*Cin sublane axis,
    # batch -> leading axis so the kernel writes the NCDHW-compatible layout directly.
    # TODO(synk): for large spatial sizes, fold this gather into the kernel (strided lane
    # slices over W) instead of an XLA transpose; here it is one small fused transpose.
    xr = x.reshape(N, Cin, D2, 2, H2, 2, W2, 2)
    xr = jnp.transpose(xr, (0, 3, 5, 7, 1, 2, 4, 6))      # (N, 2,2,2, Cin, D2, H2, W2)
    xr = xr.reshape(N, 8 * Cin, Pn)                       # row = offset*Cin + channel

    TP = _pick_tile(Pn)

    out = pl.pallas_call(
        _fused_conv_bn_prelu_pool_kernel,
        out_shape=jax.ShapeDtypeStruct((N, Cout, Pn), x.dtype),
        grid=(N, Pn // TP),
        in_specs=[
            pl.BlockSpec((None, 8 * Cin, TP), lambda n, i: (n, 0, i)),   # dense (32, TP) block
            pl.BlockSpec((Cout, Cin), lambda n, i: (0, 0)),              # folded weight
            pl.BlockSpec((Cout, 1), lambda n, i: (0, 0)),                # folded bias
            pl.BlockSpec(memory_space=pltpu.MemorySpace.SMEM),           # PReLU alpha (scalar)
        ],
        out_specs=pl.BlockSpec((None, Cout, TP), lambda n, i: (n, 0, i)),
        compiler_params=pltpu.CompilerParams(
            dimension_semantics=("parallel", "parallel")),
    )(xr, w_eff, b_eff[:, None], params["prelu_alpha"].reshape(-1))

    # (N, Cout, Pn) -> (N, Cout, D2, H2, W2): contiguous reshape, no transpose / HBM rewrite.
    return out.reshape(N, Cout, D2, H2, W2)


# ----------------------------------------------------------------------------
# Pure-JAX reference (for correctness check)
# ----------------------------------------------------------------------------
def covolution_with_pooling_reference(x, params):
    y = jnp.einsum("ncdhw,oc->nodhw", x, params["conv_w"])
    y = y + params["conv_b"][None, :, None, None, None]
    scale = params["bn_gamma"] * jax.lax.rsqrt(params["bn_var"] + params["bn_eps"])
    y = (y - params["bn_mean"][None, :, None, None, None]) * scale[None, :, None, None, None] \
        + params["bn_beta"][None, :, None, None, None]
    alpha = params["prelu_alpha"].reshape(())
    y = jnp.where(y >= 0.0, y, alpha * y)
    n, co, d, h, w = y.shape
    if w % 2 == 1:
        y = jnp.pad(y, ((0, 0), (0, 0), (1, 1), (1, 1), (1, 1)))
        n, co, d, h, w = y.shape
    d2, h2, w2 = d // 2, h // 2, w // 2
    y = y[:, :, : d2 * 2, : h2 * 2, : w2 * 2].reshape(n, co, d2, 2, h2, 2, w2, 2)
    return y.mean(axis=(3, 5, 7))


# ----------------------------------------------------------------------------
# Deterministic synthetic parameters
# ----------------------------------------------------------------------------
def init_params(key, in_channels=4, out_channels=8):
    k1, k2, k3, k4, k5, k6 = jax.random.split(key, 6)
    return {
        "conv_w": 0.2 * jax.random.normal(k1, (out_channels, in_channels), jnp.float32),
        "conv_b": 0.1 * jax.random.normal(k2, (out_channels,), jnp.float32),
        "bn_gamma": 1.0 + 0.1 * jax.random.normal(k3, (out_channels,), jnp.float32),
        "bn_beta": 0.1 * jax.random.normal(k4, (out_channels,), jnp.float32),
        "bn_mean": 0.1 * jax.random.normal(k5, (out_channels,), jnp.float32),
        "bn_var": jnp.abs(jax.random.normal(k6, (out_channels,), jnp.float32)) + 0.5,
        "bn_eps": jnp.float32(1e-5),
        "prelu_alpha": jnp.full((1, 1), 0.2, jnp.float32),   # PReLU init=0.2, num_parameters=1
    }


if __name__ == "__main__":
    key = jax.random.PRNGKey(0)
    kp, kx = jax.random.split(key)

    in_channels, out_channels = 4, 8
    params = init_params(kp, in_channels=in_channels, out_channels=out_channels)

    # NCDHW input (spatial_dims=3): batch=2, channels=4, spatial=16
    x = jax.random.normal(kx, (2, in_channels, 16, 16, 16), jnp.float32)

    fwd = jax.jit(covolution_with_pooling)
    y = fwd(x, params)
    jax.block_until_ready(y)

    assert y.shape == (2, out_channels, 8, 8, 8)
    assert y.dtype == jnp.float32
    assert bool(jnp.all(jnp.isfinite(y)))

    y_ref = covolution_with_pooling_reference(x, params)
    assert bool(jnp.allclose(y, y_ref, atol=1e-4, rtol=1e-4))

    print("KERNEL_OK")
</pallas_src>

<mosaic_0001>
module attributes {stable_mosaic.version = 11 : i64} {
  func.func @_fused_conv_bn_prelu_pool_kernel(%arg0: i32, %arg1: i32, %arg2: memref<1x32x512xf32, #tpu.memory_space<vmem>>, %arg3: memref<8x4xf32, #tpu.memory_space<vmem>>, %arg4: memref<8x1xf32, #tpu.memory_space<vmem>>, %arg5: memref<1xf32, #tpu.memory_space<smem>>, %arg6: memref<1x8x512xf32, #tpu.memory_space<vmem>>) attributes {dimension_semantics = [#tpu.dimension_semantics<parallel>, #tpu.dimension_semantics<parallel>], iteration_bounds = array<i64: 2, 1>, scalar_prefetch = 0 : i64, scratch_operands = 0 : i64, tpu.core_type = #tpu.core_type<tc>, window_params = [{transform_indices = @transform_0, window_bounds = array<i64: 1, 32, 512>}, {pipeline_mode = #tpu.pipeline_mode<synchronous>, transform_indices = @transform_1, window_bounds = array<i64: 8, 4>}, {pipeline_mode = #tpu.pipeline_mode<synchronous>, transform_indices = @transform_2, window_bounds = array<i64: 8, 1>}, {transform_indices = @transform_3, window_bounds = array<i64: 1>}, {transform_indices = @transform_4, window_bounds = array<i64: 1, 8, 512>}]} {
    %c0 = arith.constant 0 : index
    %c0_0 = arith.constant 0 : index
    %0 = vector.load %arg3[%c0, %c0_0] : memref<8x4xf32, #tpu.memory_space<vmem>>, vector<8x4xf32>
    %c0_1 = arith.constant 0 : index
    %c0_2 = arith.constant 0 : index
    %1 = vector.load %arg4[%c0_1, %c0_2] : memref<8x1xf32, #tpu.memory_space<vmem>>, vector<8x1xf32>
    %c0_3 = arith.constant 0 : index
    %2 = memref.load %arg5[%c0_3] : memref<1xf32, #tpu.memory_space<smem>>
    %3 = vector.shape_cast %1 : vector<8x1xf32> to vector<8x1xf32>
    %4 = vector.broadcast %3 : vector<8x1xf32> to vector<8x512xf32>
    %c0_4 = arith.constant 0 : index
    %c0_5 = arith.constant 0 : index
    %c0_6 = arith.constant 0 : index
    %5 = vector.load %arg2[%c0_4, %c0_5, %c0_6] : memref<1x32x512xf32, #tpu.memory_space<vmem>>, vector<1x1x512xf32>
    %6 = vector.shape_cast %5 : vector<1x1x512xf32> to vector<1x512xf32>
    %7 = vector.extract_strided_slice %0 {offsets = [0, 0], sizes = [8, 1], strides = [1, 1]} : vector<8x4xf32> to vector<8x1xf32>
    %8 = vector.broadcast %7 : vector<8x1xf32> to vector<8x512xf32>
    %9 = vector.broadcast %6 : vector<1x512xf32> to vector<8x512xf32>
    %10 = arith.mulf %8, %9 : vector<8x512xf32>
    %11 = arith.addf %4, %10 : vector<8x512xf32>
    %c0_7 = arith.constant 0 : index
    %c1 = arith.constant 1 : index
    %c0_8 = arith.constant 0 : index
    %12 = vector.load %arg2[%c0_7, %c1, %c0_8] : memref<1x32x512xf32, #tpu.memory_space<vmem>>, vector<1x1x512xf32>
    %13 = vector.shape_cast %12 : vector<1x1x512xf32> to vector<1x512xf32>
    %14 = vector.extract_strided_slice %0 {offsets = [0, 1], sizes = [8, 1], strides = [1, 1]} : vector<8x4xf32> to vector<8x1xf32>
    %15 = vector.broadcast %14 : vector<8x1xf32> to vector<8x512xf32>
    %16 = vector.broadcast %13 : vector<1x512xf32> to vector<8x512xf32>
    %17 = arith.mulf %15, %16 : vector<8x512xf32>
    %18 = arith.addf %11, %17 : vector<8x512xf32>
    %c0_9 = arith.constant 0 : index
    %c2 = arith.constant 2 : index
    %c0_10 = arith.constant 0 : index
    %19 = vector.load %arg2[%c0_9, %c2, %c0_10] : memref<1x32x512xf32, #tpu.memory_space<vmem>>, vector<1x1x512xf32>
    %20 = vector.shape_cast %19 : vector<1x1x512xf32> to vector<1x512xf32>
    %21 = vector.extract_strided_slice %0 {offsets = [0, 2], sizes = [8, 1], strides = [1, 1]} : vector<8x4xf32> to vector<8x1xf32>
    %22 = vector.broadcast %21 : vector<8x1xf32> to vector<8x512xf32>
    %23 = vector.broadcast %20 : vector<1x512xf32> to vector<8x512xf32>
    %24 = arith.mulf %22, %23 : vector<8x512xf32>
    %25 = arith.addf %18, %24 : vector<8x512xf32>
    %c0_11 = arith.constant 0 : index
    %c3 = arith.constant 3 : index
    %c0_12 = arith.constant 0 : index
    %26 = vector.load %arg2[%c0_11, %c3, %c0_12] : memref<1x32x512xf32, #tpu.memory_space<vmem>>, vector<1x1x512xf32>
    %27 = vector.shape_cast %26 : vector<1x1x512xf32> to vector<1x512xf32>
    %28 = vector.extract_strided_slice %0 {offsets = [0, 3], sizes = [8, 1], strides = [1, 1]} : vector<8x4xf32> to vector<8x1xf32>
    %29 = vector.broadcast %28 : vector<8x1xf32> to vector<8x512xf32>
    %30 = vector.broadcast %27 : vector<1x512xf32> to vector<8x512xf32>
    %31 = arith.mulf %29, %30 : vector<8x512xf32>
    %32 = arith.addf %25, %31 : vector<8x512xf32>
    %cst = arith.constant 0.000000e+00 : f32
    %33 = vector.broadcast %cst : f32 to vector<8x512xf32>
    %34 = arith.cmpf oge, %32, %33 : vector<8x512xf32>
    %35 = vector.broadcast %2 : f32 to vector<8x512xf32>
    %36 = arith.mulf %35, %32 : vector<8x512xf32>
    %37 = arith.select %34, %32, %36 : vector<8x512xi1>, vector<8x512xf32>
    %c0_13 = arith.constant 0 : index
    %c4 = arith.constant 4 : index
    %c0_14 = arith.constant 0 : index
    %38 = vector.load %arg2[%c0_13, %c4, %c0_14] : memref<1x32x512xf32, #tpu.memory_space<vmem>>, vector<1x1x512xf32>
    %39 = vector.shape_cast %38 : vector<1x1x512xf32> to vector<1x512xf32>
    %40 = vector.extract_strided_slice %0 {offsets = [0, 0], sizes = [8, 1], strides = [1, 1]} : vector<8x4xf32> to vector<8x1xf32>
    %41 = vector.broadcast %40 : vector<8x1xf32> to vector<8x512xf32>
    %42 = vector.broadcast %39 : vector<1x512xf32> to vector<8x512xf32>
    %43 = arith.mulf %41, %42 : vector<8x512xf32>
    %44 = arith.addf %4, %43 : vector<8x512xf32>
    %c0_15 = arith.constant 0 : index
    %c5 = arith.constant 5 : index
    %c0_16 = arith.constant 0 : index
    %45 = vector.load %arg2[%c0_15, %c5, %c0_16] : memref<1x32x512xf32, #tpu.memory_space<vmem>>, vector<1x1x512xf32>
    %46 = vector.shape_cast %45 : vector<1x1x512xf32> to vector<1x512xf32>
    %47 = vector.extract_strided_slice %0 {offsets = [0, 1], sizes = [8, 1], strides = [1, 1]} : vector<8x4xf32> to vector<8x1xf32>
    %48 = vector.broadcast %47 : vector<8x1xf32> to vector<8x512xf32>
    %49 = vector.broadcast %46 : vector<1x512xf32> to vector<8x512xf32>
    %50 = arith.mulf %48, %49 : vector<8x512xf32>
    %51 = arith.addf %44, %50 : vector<8x512xf32>
    %c0_17 = arith.constant 0 : index
    %c6 = arith.constant 6 : index
    %c0_18 = arith.constant 0 : index
    %52 = vector.load %arg2[%c0_17, %c6, %c0_18] : memref<1x32x512xf32, #tpu.memory_space<vmem>>, vector<1x1x512xf32>
    %53 = vector.shape_cast %52 : vector<1x1x512xf32> to vector<1x512xf32>
    %54 = vector.extract_strided_slice %0 {offsets = [0, 2], sizes = [8, 1], strides = [1, 1]} : vector<8x4xf32> to vector<8x1xf32>
    %55 = vector.broadcast %54 : vector<8x1xf32> to vector<8x512xf32>
    %56 = vector.broadcast %53 : vector<1x512xf32> to vector<8x512xf32>
    %57 = arith.mulf %55, %56 : vector<8x512xf32>
    %58 = arith.addf %51, %57 : vector<8x512xf32>
    %c0_19 = arith.constant 0 : index
    %c7 = arith.constant 7 : index
    %c0_20 = arith.constant 0 : index
    %59 = vector.load %arg2[%c0_19, %c7, %c0_20] : memref<1x32x512xf32, #tpu.memory_space<vmem>>, vector<1x1x512xf32>
    %60 = vector.shape_cast %59 : vector<1x1x512xf32> to vector<1x512xf32>
    %61 = vector.extract_strided_slice %0 {offsets = [0, 3], sizes = [8, 1], strides = [1, 1]} : vector<8x4xf32> to vector<8x1xf32>
    %62 = vector.broadcast %61 : vector<8x1xf32> to vector<8x512xf32>
    %63 = vector.broadcast %60 : vector<1x512xf32> to vector<8x512xf32>
    %64 = arith.mulf %62, %63 : vector<8x512xf32>
    %65 = arith.addf %58, %64 : vector<8x512xf32>
    %cst_21 = arith.constant 0.000000e+00 : f32
    %66 = vector.broadcast %cst_21 : f32 to vector<8x512xf32>
    %67 = arith.cmpf oge, %65, %66 : vector<8x512xf32>
    %68 = vector.broadcast %2 : f32 to vector<8x512xf32>
    %69 = arith.mulf %68, %65 : vector<8x512xf32>
    %70 = arith.select %67, %65, %69 : vector<8x512xi1>, vector<8x512xf32>
    %71 = arith.addf %37, %70 : vector<8x512xf32>
    %c0_22 = arith.constant 0 : index
    %c8 = arith.constant 8 : index
    %c0_23 = arith.constant 0 : index
    %72 = vector.load %arg2[%c0_22, %c8, %c0_23] : memref<1x32x512xf32, #tpu.memory_space<vmem>>, vector<1x1x512xf32>
    %73 = vector.shape_cast %72 : vector<1x1x512xf32> to vector<1x512xf32>
    %74 = vector.extract_strided_slice %0 {offsets = [0, 0], sizes = [8, 1], strides = [1, 1]} : vector<8x4xf32> to vector<8x1xf32>
    %75 = vector.broadcast %74 : vector<8x1xf32> to vector<8x512xf32>
    %76 = vector.broadcast %73 : vector<1x512xf32> to vector<8x512xf32>
    %77 = arith.mulf %75, %76 : vector<8x512xf32>
    %78 = arith.addf %4, %77 : vector<8x512xf32>
    %c0_24 = arith.constant 0 : index
    %c9 = arith.constant 9 : index
    %c0_25 = arith.constant 0 : index
    %79 = vector.load %arg2[%c0_24, %c9, %c0_25] : memref<1x32x512xf32, #tpu.memory_space<vmem>>, vector<1x1x512xf32>
    %80 = vector.shape_cast %79 : vector<1x1x512xf32> to vector<1x512xf32>
    %81 = vector.extract_strided_slice %0 {offsets = [0, 1], sizes = [8, 1], strides = [1, 1]} : vector<8x4xf32> to vector<8x1xf32>
    %82 = vector.broadcast %81 : vector<8x1xf32> to vector<8x512xf32>
    %83 = vector.broadcast %80 : vector<1x512xf32> to vector<8x512xf32>
    %84 = arith.mulf %82, %83 : vector<8x512xf32>
    %85 = arith.addf %78, %84 : vector<8x512xf32>
    %c0_26 = arith.constant 0 : index
    %c10 = arith.constant 10 : index
    %c0_27 = arith.constant 0 : index
    %86 = vector.load %arg2[%c0_26, %c10, %c0_27] : memref<1x32x512xf32, #tpu.memory_space<vmem>>, vector<1x1x512xf32>
    %87 = vector.shape_cast %86 : vector<1x1x512xf32> to vector<1x512xf32>
    %88 = vector.extract_strided_slice %0 {offsets = [0, 2], sizes = [8, 1], strides = [1, 1]} : vector<8x4xf32> to vector<8x1xf32>
    %89 = vector.broadcast %88 : vector<8x1xf32> to vector<8x512xf32>
    %90 = vector.broadcast %87 : vector<1x512xf32> to vector<8x512xf32>
    %91 = arith.mulf %89, %90 : vector<8x512xf32>
    %92 = arith.addf %85, %91 : vector<8x512xf32>
    %c0_28 = arith.constant 0 : index
    %c11 = arith.constant 11 : index
    %c0_29 = arith.constant 0 : index
    %93 = vector.load %arg2[%c0_28, %c11, %c0_29] : memref<1x32x512xf32, #tpu.memory_space<vmem>>, vector<1x1x512xf32>
    %94 = vector.shape_cast %93 : vector<1x1x512xf32> to vector<1x512xf32>
    %95 = vector.extract_strided_slice %0 {offsets = [0, 3], sizes = [8, 1], strides = [1, 1]} : vector<8x4xf32> to vector<8x1xf32>
    %96 = vector.broadcast %95 : vector<8x1xf32> to vector<8x512xf32>
    %97 = vector.broadcast %94 : vector<1x512xf32> to vector<8x512xf32>
    %98 = arith.mulf %96, %97 : vector<8x512xf32>
    %99 = arith.addf %92, %98 : vector<8x512xf32>
    %cst_30 = arith.constant 0.000000e+00 : f32
    %100 = vector.broadcast %cst_30 : f32 to vector<8x512xf32>
    %101 = arith.cmpf oge, %99, %100 : vector<8x512xf32>
    %102 = vector.broadcast %2 : f32 to vector<8x512xf32>
    %103 = arith.mulf %102, %99 : vector<8x512xf32>
    %104 = arith.select %101, %99, %103 : vector<8x512xi1>, vector<8x512xf32>
    %105 = arith.addf %71, %104 : vector<8x512xf32>
    %c0_31 = arith.constant 0 : index
    %c12 = arith.constant 12 : index
    %c0_32 = arith.constant 0 : index
    %106 = vector.load %arg2[%c0_31, %c12, %c0_32] : memref<1x32x512xf32, #tpu.memory_space<vmem>>, vector<1x1x512xf32>
    %107 = vector.shape_cast %106 : vector<1x1x512xf32> to vector<1x512xf32>
    %108 = vector.extract_strided_slice %0 {offsets = [0, 0], sizes = [8, 1], strides = [1, 1]} : vector<8x4xf32> to vector<8x1xf32>
    %109 = vector.broadcast %108 : vector<8x1xf32> to vector<8x512xf32>
    %110 = vector.broadcast %107 : vector<1x512xf32> to vector<8x512xf32>
    %111 = arith.mulf %109, %110 : vector<8x512xf32>
    %112 = arith.addf %4, %111 : vector<8x512xf32>
    %c0_33 = arith.constant 0 : index
    %c13 = arith.constant 13 : index
    %c0_34 = arith.constant 0 : index
    %113 = vector.load %arg2[%c0_33, %c13, %c0_34] : memref<1x32x512xf32, #tpu.memory_space<vmem>>, vector<1x1x512xf32>
    %114 = vector.shape_cast %113 : vector<1x1x512xf32> to vector<1x512xf32>
    %115 = vector.extract_strided_slice %0 {offsets = [0, 1], sizes = [8, 1], strides = [1, 1]} : vector<8x4xf32> to vector<8x1xf32>
    %116 = vector.broadcast %115 : vector<8x1xf32> to vector<8x512xf32>
    %117 = vector.broadcast %114 : vector<1x512xf32> to vector<8x512xf32>
    %118 = arith.mulf %116, %117 : vector<8x512xf32>
    %119 = arith.addf %112, %118 : vector<8x512xf32>
    %c0_35 = arith.constant 0 : index
    %c14 = arith.constant 14 : index
    %c0_36 = arith.constant 0 : index
    %120 = vector.load %arg2[%c0_35, %c14, %c0_36] : memref<1x32x512xf32, #tpu.memory_space<vmem>>, vector<1x1x512xf32>
    %121 = vector.shape_cast %120 : vector<1x1x512xf32> to vector<1x512xf32>
    %122 = vector.extract_strided_slice %0 {offsets = [0, 2], sizes = [8, 1], strides = [1, 1]} : vector<8x4xf32> to vector<8x1xf32>
    %123 = vector.broadcast %122 : vector<8x1xf32> to vector<8x512xf32>
    %124 = vector.broadcast %121 : vector<1x512xf32> to vector<8x512xf32>
    %125 = arith.mulf %123, %124 : vector<8x512xf32>
    %126 = arith.addf %119, %125 : vector<8x512xf32>
    %c0_37 = arith.constant 0 : index
    %c15 = arith.constant 15 : index
    %c0_38 = arith.constant 0 : index
    %127 = vector.load %arg2[%c0_37, %c15, %c0_38] : memref<1x32x512xf32, #tpu.memory_space<vmem>>, vector<1x1x512xf32>
    %128 = vector.shape_cast %127 : vector<1x1x512xf32> to vector<1x512xf32>
    %129 = vector.extract_strided_slice %0 {offsets = [0, 3], sizes = [8, 1], strides = [1, 1]} : vector<8x4xf32> to vector<8x1xf32>
    %130 = vector.broadcast %129 : vector<8x1xf32> to vector<8x512xf32>
    %131 = vector.broadcast %128 : vector<1x512xf32> to vector<8x512xf32>
    %132 = arith.mulf %130, %131 : vector<8x512xf32>
    %133 = arith.addf %126, %132 : vector<8x512xf32>
    %cst_39 = arith.constant 0.000000e+00 : f32
    %134 = vector.broadcast %cst_39 : f32 to vector<8x512xf32>
    %135 = arith.cmpf oge, %133, %134 : vector<8x512xf32>
    %136 = vector.broadcast %2 : f32 to vector<8x512xf32>
    %137 = arith.mulf %136, %133 : vector<8x512xf32>
    %138 = arith.select %135, %133, %137 : vector<8x512xi1>, vector<8x512xf32>
    %139 = arith.addf %105, %138 : vector<8x512xf32>
    %c0_40 = arith.constant 0 : index
    %c16 = arith.constant 16 : index
    %c0_41 = arith.constant 0 : index
    %140 = vector.load %arg2[%c0_40, %c16, %c0_41] : memref<1x32x512xf32, #tpu.memory_space<vmem>>, vector<1x1x512xf32>
    %141 = vector.shape_cast %140 : vector<1x1x512xf32> to vector<1x512xf32>
    %142 = vector.extract_strided_slice %0 {offsets = [0, 0], sizes = [8, 1], strides = [1, 1]} : vector<8x4xf32> to vector<8x1xf32>
    %143 = vector.broadcast %142 : vector<8x1xf32> to vector<8x512xf32>
    %144 = vector.broadcast %141 : vector<1x512xf32> to vector<8x512xf32>
    %145 = arith.mulf %143, %144 : vector<8x512xf32>
    %146 = arith.addf %4, %145 : vector<8x512xf32>
    %c0_42 = arith.constant 0 : index
    %c17 = arith.constant 17 : index
    %c0_43 = arith.constant 0 : index
    %147 = vector.load %arg2[%c0_42, %c17, %c0_43] : memref<1x32x512xf32, #tpu.memory_space<vmem>>, vector<1x1x512xf32>
    %148 = vector.shape_cast %147 : vector<1x1x512xf32> to vector<1x512xf32>
    %149 = vector.extract_strided_slice %0 {offsets = [0, 1], sizes = [8, 1], strides = [1, 1]} : vector<8x4xf32> to vector<8x1xf32>
    %150 = vector.broadcast %149 : vector<8x1xf32> to vector<8x512xf32>
    %151 = vector.broadcast %148 : vector<1x512xf32> to vector<8x512xf32>
    %152 = arith.mulf %150, %151 : vector<8x512xf32>
    %153 = arith.addf %146, %152 : vector<8x512xf32>
    %c0_44 = arith.constant 0 : index
    %c18 = arith.constant 18 : index
    %c0_45 = arith.constant 0 : index
    %154 = vector.load %arg2[%c0_44, %c18, %c0_45] : memref<1x32x512xf32, #tpu.memory_space<vmem>>, vector<1x1x512xf32>
    %155 = vector.shape_cast %154 : vector<1x1x512xf32> to vector<1x512xf32>
    %156 = vector.extract_strided_slice %0 {offsets = [0, 2], sizes = [8, 1], strides = [1, 1]} : vector<8x4xf32> to vector<8x1xf32>
    %157 = vector.broadcast %156 : vector<8x1xf32> to vector<8x512xf32>
    %158 = vector.broadcast %155 : vector<1x512xf32> to vector<8x512xf32>
    %159 = arith.mulf %157, %158 : vector<8x512xf32>
    %160 = arith.addf %153, %159 : vector<8x512xf32>
    %c0_46 = arith.constant 0 : index
    %c19 = arith.constant 19 : index
    %c0_47 = arith.constant 0 : index
    %161 = vector.load %arg2[%c0_46, %c19, %c0_47] : memref<1x32x512xf32, #tpu.memory_space<vmem>>, vector<1x1x512xf32>
    %162 = vector.shape_cast %161 : vector<1x1x512xf32> to vector<1x512xf32>
    %163 = vector.extract_strided_slice %0 {offsets = [0, 3], sizes = [8, 1], strides = [1, 1]} : vector<8x4xf32> to vector<8x1xf32>
    %164 = vector.broadcast %163 : vector<8x1xf32> to vector<8x512xf32>
    %165 = vector.broadcast %162 : vector<1x512xf32> to vector<8x512xf32>
    %166 = arith.mulf %164, %165 : vector<8x512xf32>
    %167 = arith.addf %160, %166 : vector<8x512xf32>
    %cst_48 = arith.constant 0.000000e+00 : f32
    %168 = vector.broadcast %cst_48 : f32 to vector<8x512xf32>
    %169 = arith.cmpf oge, %167, %168 : vector<8x512xf32>
    %170 = vector.broadcast %2 : f32 to vector<8x512xf32>
    %171 = arith.mulf %170, %167 : vector<8x512xf32>
    %172 = arith.select %169, %167, %171 : vector<8x512xi1>, vector<8x512xf32>
    %173 = arith.addf %139, %172 : vector<8x512xf32>
    %c0_49 = arith.constant 0 : index
    %c20 = arith.constant 20 : index
    %c0_50 = arith.constant 0 : index
    %174 = vector.load %arg2[%c0_49, %c20, %c0_50] : memref<1x32x512xf32, #tpu.memory_space<vmem>>, vector<1x1x512xf32>
    %175 = vector.shape_cast %174 : vector<1x1x512xf32> to vector<1x512xf32>
    %176 = vector.extract_strided_slice %0 {offsets = [0, 0], sizes = [8, 1], strides = [1, 1]} : vector<8x4xf32> to vector<8x1xf32>
    %177 = vector.broadcast %176 : vector<8x1xf32> to vector<8x512xf32>
    %178 = vector.broadcast %175 : vector<1x512xf32> to vector<8x512xf32>
    %179 = arith.mulf %177, %178 : vector<8x512xf32>
    %180 = arith.addf %4, %179 : vector<8x512xf32>
    %c0_51 = arith.constant 0 : index
    %c21 = arith.constant 21 : index
    %c0_52 = arith.constant 0 : index
    %181 = vector.load %arg2[%c0_51, %c21, %c0_52] : memref<1x32x512xf32, #tpu.memory_space<vmem>>, vector<1x1x512xf32>
    %182 = vector.shape_cast %181 : vector<1x1x512xf32> to vector<1x512xf32>
    %183 = vector.extract_strided_slice %0 {offsets = [0, 1], sizes = [8, 1], strides = [1, 1]} : vector<8x4xf32> to vector<8x1xf32>
    %184 = vector.broadcast %183 : vector<8x1xf32> to vector<8x512xf32>
    %185 = vector.broadcast %182 : vector<1x512xf32> to vector<8x512xf32>
    %186 = arith.mulf %184, %185 : vector<8x512xf32>
    %187 = arith.addf %180, %186 : vector<8x512xf32>
    %c0_53 = arith.constant 0 : index
    %c22 = arith.constant 22 : index
    %c0_54 = arith.constant 0 : index
    %188 = vector.load %arg2[%c0_53, %c22, %c0_54] : memref<1x32x512xf32, #tpu.memory_space<vmem>>, vector<1x1x512xf32>
    %189 = vector.shape_cast %188 : vector<1x1x512xf32> to vector<1x512xf32>
    %190 = vector.extract_strided_slice %0 {offsets = [0, 2], sizes = [8, 1], strides = [1, 1]} : vector<8x4xf32> to vector<8x1xf32>
    %191 = vector.broadcast %190 : vector<8x1xf32> to vector<8x512xf32>
    %192 = vector.broadcast %189 : vector<1x512xf32> to vector<8x512xf32>
    %193 = arith.mulf %191, %192 : vector<8x512xf32>
    %194 = arith.addf %187, %193 : vector<8x512xf32>
    %c0_55 = arith.constant 0 : index
    %c23 = arith.constant 23 : index
    %c0_56 = arith.constant 0 : index
    %195 = vector.load %arg2[%c0_55, %c23, %c0_56] : memref<1x32x512xf32, #tpu.memory_space<vmem>>, vector<1x1x512xf32>
    %196 = vector.shape_cast %195 : vector<1x1x512xf32> to vector<1x512xf32>
    %197 = vector.extract_strided_slice %0 {offsets = [0, 3], sizes = [8, 1], strides = [1, 1]} : vector<8x4xf32> to vector<8x1xf32>
    %198 = vector.broadcast %197 : vector<8x1xf32> to vector<8x512xf32>
    %199 = vector.broadcast %196 : vector<1x512xf32> to vector<8x512xf32>
    %200 = arith.mulf %198, %199 : vector<8x512xf32>
    %201 = arith.addf %194, %200 : vector<8x512xf32>
    %cst_57 = arith.constant 0.000000e+00 : f32
    %202 = vector.broadcast %cst_57 : f32 to vector<8x512xf32>
    %203 = arith.cmpf oge, %201, %202 : vector<8x512xf32>
    %204 = vector.broadcast %2 : f32 to vector<8x512xf32>
    %205 = arith.mulf %204, %201 : vector<8x512xf32>
    %206 = arith.select %203, %201, %205 : vector<8x512xi1>, vector<8x512xf32>
    %207 = arith.addf %173, %206 : vector<8x512xf32>
    %c0_58 = arith.constant 0 : index
    %c24 = arith.constant 24 : index
    %c0_59 = arith.constant 0 : index
    %208 = vector.load %arg2[%c0_58, %c24, %c0_59] : memref<1x32x512xf32, #tpu.memory_space<vmem>>, vector<1x1x512xf32>
    %209 = vector.shape_cast %208 : vector<1x1x512xf32> to vector<1x512xf32>
    %210 = vector.extract_strided_slice %0 {offsets = [0, 0], sizes = [8, 1], strides = [1, 1]} : vector<8x4xf32> to vector<8x1xf32>
    %211 = vector.broadcast %210 : vector<8x1xf32> to vector<8x512xf32>
    %212 = vector.broadcast %209 : vector<1x512xf32> to vector<8x512xf32>
    %213 = arith.mulf %211, %212 : vector<8x512xf32>
    %214 = arith.addf %4, %213 : vector<8x512xf32>
    %c0_60 = arith.constant 0 : index
    %c25 = arith.constant 25 : index
    %c0_61 = arith.constant 0 : index
    %215 = vector.load %arg2[%c0_60, %c25, %c0_61] : memref<1x32x512xf32, #tpu.memory_space<vmem>>, vector<1x1x512xf32>
    %216 = vector.shape_cast %215 : vector<1x1x512xf32> to vector<1x512xf32>
    %217 = vector.extract_strided_slice %0 {offsets = [0, 1], sizes = [8, 1], strides = [1, 1]} : vector<8x4xf32> to vector<8x1xf32>
    %218 = vector.broadcast %217 : vector<8x1xf32> to vector<8x512xf32>
    %219 = vector.broadcast %216 : vector<1x512xf32> to vector<8x512xf32>
    %220 = arith.mulf %218, %219 : vector<8x512xf32>
    %221 = arith.addf %214, %220 : vector<8x512xf32>
    %c0_62 = arith.constant 0 : index
    %c26 = arith.constant 26 : index
    %c0_63 = arith.constant 0 : index
    %222 = vector.load %arg2[%c0_62, %c26, %c0_63] : memref<1x32x512xf32, #tpu.memory_space<vmem>>, vector<1x1x512xf32>
    %223 = vector.shape_cast %222 : vector<1x1x512xf32> to vector<1x512xf32>
    %224 = vector.extract_strided_slice %0 {offsets = [0, 2], sizes = [8, 1], strides = [1, 1]} : vector<8x4xf32> to vector<8x1xf32>
    %225 = vector.broadcast %224 : vector<8x1xf32> to vector<8x512xf32>
    %226 = vector.broadcast %223 : vector<1x512xf32> to vector<8x512xf32>
    %227 = arith.mulf %225, %226 : vector<8x512xf32>
    %228 = arith.addf %221, %227 : vector<8x512xf32>
    %c0_64 = arith.constant 0 : index
    %c27 = arith.constant 27 : index
    %c0_65 = arith.constant 0 : index
    %229 = vector.load %arg2[%c0_64, %c27, %c0_65] : memref<1x32x512xf32, #tpu.memory_space<vmem>>, vector<1x1x512xf32>
    %230 = vector.shape_cast %229 : vector<1x1x512xf32> to vector<1x512xf32>
    %231 = vector.extract_strided_slice %0 {offsets = [0, 3], sizes = [8, 1], strides = [1, 1]} : vector<8x4xf32> to vector<8x1xf32>
    %232 = vector.broadcast %231 : vector<8x1xf32> to vector<8x512xf32>
    %233 = vector.broadcast %230 : vector<1x512xf32> to vector<8x512xf32>
    %234 = arith.mulf %232, %233 : vector<8x512xf32>
    %235 = arith.addf %228, %234 : vector<8x512xf32>
    %cst_66 = arith.constant 0.000000e+00 : f32
    %236 = vector.broadcast %cst_66 : f32 to vector<8x512xf32>
    %237 = arith.cmpf oge, %235, %236 : vector<8x512xf32>
    %238 = vector.broadcast %2 : f32 to vector<8x512xf32>
    %239 = arith.mulf %238, %235 : vector<8x512xf32>
    %240 = arith.select %237, %235, %239 : vector<8x512xi1>, vector<8x512xf32>
    %241 = arith.addf %207, %240 : vector<8x512xf32>
    %c0_67 = arith.constant 0 : index
    %c28 = arith.constant 28 : index
    %c0_68 = arith.constant 0 : index
    %242 = vector.load %arg2[%c0_67, %c28, %c0_68] : memref<1x32x512xf32, #tpu.memory_space<vmem>>, vector<1x1x512xf32>
    %243 = vector.shape_cast %242 : vector<1x1x512xf32> to vector<1x512xf32>
    %244 = vector.extract_strided_slice %0 {offsets = [0, 0], sizes = [8, 1], strides = [1, 1]} : vector<8x4xf32> to vector<8x1xf32>
    %245 = vector.broadcast %244 : vector<8x1xf32> to vector<8x512xf32>
    %246 = vector.broadcast %243 : vector<1x512xf32> to vector<8x512xf32>
    %247 = arith.mulf %245, %246 : vector<8x512xf32>
    %248 = arith.addf %4, %247 : vector<8x512xf32>
    %c0_69 = arith.constant 0 : index
    %c29 = arith.constant 29 : index
    %c0_70 = arith.constant 0 : index
    %249 = vector.load %arg2[%c0_69, %c29, %c0_70] : memref<1x32x512xf32, #tpu.memory_space<vmem>>, vector<1x1x512xf32>
    %250 = vector.shape_cast %249 : vector<1x1x512xf32> to vector<1x512xf32>
    %251 = vector.extract_strided_slice %0 {offsets = [0, 1], sizes = [8, 1], strides = [1, 1]} : vector<8x4xf32> to vector<8x1xf32>
    %252 = vector.broadcast %251 : vector<8x1xf32> to vector<8x512xf32>
    %253 = vector.broadcast %250 : vector<1x512xf32> to vector<8x512xf32>
    %254 = arith.mulf %252, %253 : vector<8x512xf32>
    %255 = arith.addf %248, %254 : vector<8x512xf32>
    %c0_71 = arith.constant 0 : index
    %c30 = arith.constant 30 : index
    %c0_72 = arith.constant 0 : index
    %256 = vector.load %arg2[%c0_71, %c30, %c0_72] : memref<1x32x512xf32, #tpu.memory_space<vmem>>, vector<1x1x512xf32>
    %257 = vector.shape_cast %256 : vector<1x1x512xf32> to vector<1x512xf32>
    %258 = vector.extract_strided_slice %0 {offsets = [0, 2], sizes = [8, 1], strides = [1, 1]} : vector<8x4xf32> to vector<8x1xf32>
    %259 = vector.broadcast %258 : vector<8x1xf32> to vector<8x512xf32>
    %260 = vector.broadcast %257 : vector<1x512xf32> to vector<8x512xf32>
    %261 = arith.mulf %259, %260 : vector<8x512xf32>
    %262 = arith.addf %255, %261 : vector<8x512xf32>
    %c0_73 = arith.constant 0 : index
    %c31 = arith.constant 31 : index
    %c0_74 = arith.constant 0 : index
    %263 = vector.load %arg2[%c0_73, %c31, %c0_74] : memref<1x32x512xf32, #tpu.memory_space<vmem>>, vector<1x1x512xf32>
    %264 = vector.shape_cast %263 : vector<1x1x512xf32> to vector<1x512xf32>
    %265 = vector.extract_strided_slice %0 {offsets = [0, 3], sizes = [8, 1], strides = [1, 1]} : vector<8x4xf32> to vector<8x1xf32>
    %266 = vector.broadcast %265 : vector<8x1xf32> to vector<8x512xf32>
    %267 = vector.broadcast %264 : vector<1x512xf32> to vector<8x512xf32>
    %268 = arith.mulf %266, %267 : vector<8x512xf32>
    %269 = arith.addf %262, %268 : vector<8x512xf32>
    %cst_75 = arith.constant 0.000000e+00 : f32
    %270 = vector.broadcast %cst_75 : f32 to vector<8x512xf32>
    %271 = arith.cmpf oge, %269, %270 : vector<8x512xf32>
    %272 = vector.broadcast %2 : f32 to vector<8x512xf32>
    %273 = arith.mulf %272, %269 : vector<8x512xf32>
    %274 = arith.select %271, %269, %273 : vector<8x512xi1>, vector<8x512xf32>
    %275 = arith.addf %241, %274 : vector<8x512xf32>
    %c0_76 = arith.constant 0 : index
    %c0_77 = arith.constant 0 : index
    %c0_78 = arith.constant 0 : index
    %276 = vector.load %arg6[%c0_76, %c0_77, %c0_78] : memref<1x8x512xf32, #tpu.memory_space<vmem>>, vector<1x8x512xf32>
    %277 = vector.shape_cast %276 : vector<1x8x512xf32> to vector<8x512xf32>
    %278 = vector.shape_cast %275 : vector<8x512xf32> to vector<1x8x512xf32>
    tpu.vector_store %arg6[%c0_76, %c0_77, %c0_78], %278 {strides = array<i32>} : memref<1x8x512xf32, #tpu.memory_space<vmem>>, vector<1x8x512xf32>,
    return
  }
  func.func @transform_0(%arg0: i32, %arg1: i32) -> (i32, i32, i32) {
    %c0_i32 = arith.constant 0 : i32
    %c0_i32_0 = arith.constant 0 : i32
    return %arg0, %c0_i32, %arg1 : i32, i32, i32
  }
  func.func @transform_1(%arg0: i32, %arg1: i32) -> (i32, i32) {
    %c0_i32 = arith.constant 0 : i32
    %c0_i32_0 = arith.constant 0 : i32
    %c0_i32_1 = arith.constant 0 : i32
    return %c0_i32, %c0_i32_0 : i32, i32
  }
  func.func @transform_2(%arg0: i32, %arg1: i32) -> (i32, i32) {
    %c0_i32 = arith.constant 0 : i32
    %c0_i32_0 = arith.constant 0 : i32
    %c0_i32_1 = arith.constant 0 : i32
    return %c0_i32, %c0_i32_0 : i32, i32
  }
  func.func @transform_3(%arg0: i32, %arg1: i32) -> i32 {
    %c0_i32 = arith.constant 0 : i32
    %c0_i32_0 = arith.constant 0 : i32
    return %c0_i32 : i32
  }
  func.func @transform_4(%arg0: i32, %arg1: i32) -> (i32, i32, i32) {
    %c0_i32 = arith.constant 0 : i32
    %c0_i32_0 = arith.constant 0 : i32
    return %arg0, %c0_i32, %arg1 : i32, i32, i32
  }
}

</mosaic_0001>

<llo_original>
// kernel: covolution_with_pooling.1
$region0: #{covolution_with_pooling.1}
  #allocation0 [shape = 'u32[]', space=smem, size = 0x4, offset = 0x4, fixed_abs, tag = 'smem constant byte address 0x4 - core index']
  #allocation1 [shape = 'u32[144,128]{1,0:T(1,128)}', space=vmem, size = 0x12000, scoped, tag = 'internal scratch']
  #allocation2 [shape = 'f32[1]{0:T(128)S(6)}', space=smem, size = 0x200, scoped, tag = 'scoped memory for covolution_with_pooling.1']
  %s0 = inlined_call_operand.vmem [shape: f32[2,32,512], index: 0, kind: input, shape index: {}]
  %s1 = inlined_call_operand.vmem [shape: f32[8,4], index: 1, kind: input, shape index: {}]
  %s2 = inlined_call_operand.vmem [shape: f32[8,1], index: 2, kind: input, shape index: {}]
  %s3 = inlined_call_operand.<no memory space> [shape: f32[1], index: 3, kind: input, shape index: {}]
  %s4 = inlined_call_operand.vmem [shape: f32[2,8,512], index: 4, kind: output, shape index: {}]
  %s5 = sld [smem:[#allocation0]]
  $region49: #{covolution_with_pooling.1} parent=0
    _
  %s7 = ssub.s32 1, %s5
  %s8 = scalar_select 0, %s7, %s5
  %9 = sst [smem:[#allocation2]] %s3
  loop: start=0, step=1, limit=4
  $region2: #{covolution_with_pooling.1} parent=0 // loop_pre_header
    _
  $region3: #{covolution_with_pooling.1} parent=0 // loop_header
    %s11 = sphi 0, %s15
    %p12 = scmp.ge.s32.totalorder %s11, 4
    %s18 = sphi 0, %s30
    %s19 = sphi 0, %s26
    %s20 = sphi 0, %s18
    %s21 = sphi 0, %s19
    %s22 = sphi 0, %s20
    %s23 = sphi 0, %s21
    %s35 = sphi 0, %s37
    %s38 = sphi 0, %s35
    %s39 = sphi 0, %s38
    %s55 = sphi 0, %s39
    %s59 = sphi 0, %s59
    %s61 = sphi 0, %s59
    %s62 = sphi 0, %s61
    %s76 = sphi 0, %s62
    %s80 = sphi 0, %s80
    %s82 = sphi 0, %s80
    %s83 = sphi 0, %s82
    %s97 = sphi 0, %s83
    %s101 = sphi 0, %s101
    %s103 = sphi 0, %s101
    %s104 = sphi 0, %s103
    %s118 = sphi 0, %s104
    %s126 = sphi 0, %s128
    %s129 = sphi 0, %s126
    %s130 = sphi 0, %s129
    %s146 = sphi 0, %s130
  $region4: #{covolution_with_pooling.1} parent=0 // loop_header_branch
    %14 = sbr.rel (%p12) target = $region8
  $region5: #{covolution_with_pooling.1} parent=0 // loop_body
    %s16 = ssub.s32 %s11, 1
    %s17 = ssub.s32 %s11, 2
    %s24 = sadd.s32 1, %s19
    %p25 = scmp.ge.s32.totalorder %s24, 1
    %s26 = scalar_select %p25, 0, %s24
    %s27 = sadd.s32 1, %s18
    %s28 = scalar_select %p25, %s27, %s18
    %p29 = scmp.ge.s32.totalorder %s28, 2
    %s30 = scalar_select %p29, 0, %s28
    %s31 = ssub.s32 %s18, %s30
    %s32 = ssub.s32 %s19, %s26
    %s33 = sor.u32 %s31, %s32
    %p34 = scmp.eq.s32.totalorder %s33, 0
    %s36 = sadd.s32 %s35, 1
    %s37 = scalar_select %p34, %s35, %s36
    %p40 = pneg %p34
    %p41 = scmp.eq.s32.totalorder %s11, 1
    %p42 = por %p40, %p41
    %p43 = scmp.ne.s32.totalorder %s35, %s38
    %p44 = scmp.eq.s32.totalorder %s11, 0
    %p45 = por %p43, %p44
    %p46 = scmp.ne.s32.totalorder %s35, %s38
    %p47 = scmp.eq.s32.totalorder %s16, 1
    %p48 = por %p46, %p47
    %p49 = scmp.ne.s32.totalorder %s38, %s39
    %p50 = scmp.eq.s32.totalorder %s16, 0
    %p51 = por %p49, %p50
    %p52 = scmp.ne.s32.totalorder %s38, %s39
    %p53 = scmp.eq.s32.totalorder %s17, 1
    %p54 = por %p52, %p53
    %p56 = scmp.ne.s32.totalorder %s39, %s55
    %p57 = scmp.eq.s32.totalorder %s17, 0
    %p58 = por %p56, %p57
    %s60 = sadd.s32 %s59, 1
    %p63 = scmp.eq.s32.totalorder %s11, 1
    %p64 = scmp.ne.s32.totalorder %s59, %s61
    %p65 = scmp.eq.s32.totalorder %s11, 0
    %p66 = por %p64, %p65
    %p67 = scmp.ne.s32.totalorder %s59, %s61
    %p68 = scmp.eq.s32.totalorder %s16, 1
    %p69 = por %p67, %p68
    %p70 = scmp.ne.s32.totalorder %s61, %s62
    %p71 = scmp.eq.s32.totalorder %s16, 0
    %p72 = por %p70, %p71
    %p73 = scmp.ne.s32.totalorder %s61, %s62
    %p74 = scmp.eq.s32.totalorder %s17, 1
    %p75 = por %p73, %p74
    %p77 = scmp.ne.s32.totalorder %s62, %s76
    %p78 = scmp.eq.s32.totalorder %s17, 0
    %p79 = por %p77, %p78
    %s81 = sadd.s32 %s80, 1
    %p84 = scmp.eq.s32.totalorder %s11, 1
    %p85 = scmp.ne.s32.totalorder %s80, %s82
    %p86 = scmp.eq.s32.totalorder %s11, 0
    %p87 = por %p85, %p86
    %p88 = scmp.ne.s32.totalorder %s80, %s82
    %p89 = scmp.eq.s32.totalorder %s16, 1
    %p90 = por %p88, %p89
    %p91 = scmp.ne.s32.totalorder %s82, %s83
    %p92 = scmp.eq.s32.totalorder %s16, 0
    %p93 = por %p91, %p92
    %p94 = scmp.ne.s32.totalorder %s82, %s83
    %p95 = scmp.eq.s32.totalorder %s17, 1
    %p96 = por %p94, %p95
    %p98 = scmp.ne.s32.totalorder %s83, %s97
    %p99 = scmp.eq.s32.totalorder %s17, 0
    %p100 = por %p98, %p99
    %s102 = sadd.s32 %s101, 1
    %p105 = scmp.eq.s32.totalorder %s11, 1
    %p106 = scmp.ne.s32.totalorder %s101, %s103
    %p107 = scmp.eq.s32.totalorder %s11, 0
    %p108 = por %p106, %p107
    %p109 = scmp.ne.s32.totalorder %s101, %s103
    %p110 = scmp.eq.s32.totalorder %s16, 1
    %p111 = por %p109, %p110
    %p112 = scmp.ne.s32.totalorder %s103, %s104
    %p113 = scmp.eq.s32.totalorder %s16, 0
    %p114 = por %p112, %p113
    %p115 = scmp.ne.s32.totalorder %s103, %s104
    %p116 = scmp.eq.s32.totalorder %s17, 1
    %p117 = por %p115, %p116
    %p119 = scmp.ne.s32.totalorder %s104, %s118
    %p120 = scmp.eq.s32.totalorder %s17, 0
    %p121 = por %p119, %p120
    %s122 = ssub.s32 %s18, %s30
    %s123 = ssub.s32 %s19, %s26
    %s124 = sor.u32 %s122, %s123
    %p125 = scmp.eq.s32.totalorder %s124, 0
    %s127 = sadd.s32 %s126, 1
    %s128 = scalar_select %p125, %s126, %s127
    %p131 = pneg %p125
    %p132 = scmp.eq.s32.totalorder %s11, 1
    %p133 = por %p131, %p132
    %p134 = scmp.ne.s32.totalorder %s126, %s129
    %p135 = scmp.eq.s32.totalorder %s11, 0
    %p136 = por %p134, %p135
    %p137 = scmp.ne.s32.totalorder %s126, %s129
    %p138 = scmp.eq.s32.totalorder %s16, 1
    %p139 = por %p137, %p138
    %p140 = scmp.ne.s32.totalorder %s129, %s130
    %p141 = scmp.eq.s32.totalorder %s16, 0
    %p142 = por %p140, %p141
    %p143 = scmp.ne.s32.totalorder %s129, %s130
    %p144 = scmp.eq.s32.totalorder %s17, 1
    %p145 = por %p143, %p144
    %p147 = scmp.ne.s32.totalorder %s130, %s146
    %p148 = scmp.eq.s32.totalorder %s17, 0
    %p149 = por %p147, %p148
    %p150 = scmp.le.s32.totalorder 1, %s11
    %p151 = scmp.lt.s32.totalorder %s11, 3
    %p152 = pnand %p150, %p151
    %p153 = pneg %p152
    // Predicated region
    $region9: #{covolution_with_pooling.1} parent=5 // pred_check
      _
    $region10: #{covolution_with_pooling.1} parent=5 // pred_check_branch
      %155 = sbr.rel (%p152) target = $region12
    $region11: #{covolution_with_pooling.1} parent=5 // pred_region
      %s156 = ssub.s32 %s11, 1
      // Predicated region
      $region13: #{covolution_with_pooling.1} parent=11 // pred_check
        %p157 = pneg %p72
      $region14: #{covolution_with_pooling.1} parent=11 // pred_check_branch
        %159 = sbr.rel (%p157) target = $region16
      $region15: #{covolution_with_pooling.1} parent=11 // pred_region
        _
      $region16: #{covolution_with_pooling.1} parent=11 // pred_fallthru
        _
      // Predicated region
      $region17: #{covolution_with_pooling.1} parent=11 // pred_check
        %p160 = pneg %p93
      $region18: #{covolution_with_pooling.1} parent=11 // pred_check_branch
        %162 = sbr.rel (%p160) target = $region20
      $region19: #{covolution_with_pooling.1} parent=11 // pred_region
        _
      $region20: #{covolution_with_pooling.1} parent=11 // pred_fallthru
        _
      // Predicated region
      $region21: #{covolution_with_pooling.1} parent=11 // pred_check
        %p163 = pneg %p114
      $region22: #{covolution_with_pooling.1} parent=11 // pred_check_branch
        %165 = sbr.rel (%p163) target = $region24
      $region23: #{covolution_with_pooling.1} parent=11 // pred_region
        _
      $region24: #{covolution_with_pooling.1} parent=11 // pred_fallthru
        _
    $region12: #{covolution_with_pooling.1} parent=5 // pred_fallthru
      _
    %p166 = scmp.lt.s32.totalorder %s11, 2
    // Predicated region
    $region25: #{covolution_with_pooling.1} parent=5 // pred_check
      %p167 = pneg %p166
    $region26: #{covolution_with_pooling.1} parent=5 // pred_check_branch
      %169 = sbr.rel (%p167) target = $region28
    $region27: #{covolution_with_pooling.1} parent=5 // pred_region
      // Predicated region
      $region29: #{covolution_with_pooling.1} parent=27 // pred_check
        %p170 = pneg %p45
      $region30: #{covolution_with_pooling.1} parent=27 // pred_check_branch
        %172 = sbr.rel (%p170) target = $region32
      $region31: #{covolution_with_pooling.1} parent=27 // pred_region
        %s173 = smul.u32 4, %s19
        %p174 = scmp.lt.s32.totalorder %s18, 1
        %s175 = scalar_select %p174, %s18, 1
        %p176 = scmp.lt.s32.totalorder %s173, 3
        %s177 = scalar_select %p176, %s173, 3
        %s178 = smul.addr %s175, 16
        %s179 = sadd.s32 %s177, %s178
        %s180 = smul.addr %s179, 8
        %s181 = scalar_lea.vmem %s0, %s180
        %s182 = smul.u32 4, %s19
      $region32: #{covolution_with_pooling.1} parent=27 // pred_fallthru
        _
    $region28: #{covolution_with_pooling.1} parent=5 // pred_fallthru
      _
    %p183 = scmp.le.s32.totalorder 1, %s11
    %p184 = scmp.lt.s32.totalorder %s11, 3
    %p185 = pnand %p183, %p184
    %p186 = pneg %p185
    // Predicated region
    $region33: #{covolution_with_pooling.1} parent=5 // pred_check
      _
    $region34: #{covolution_with_pooling.1} parent=5 // pred_check_branch
      %188 = sbr.rel (%p185) target = $region36
    $region35: #{covolution_with_pooling.1} parent=5 // pred_region
      %s189 = ssub.s32 %s11, 1
      %s190 = smul.u32 4, %s21
      %p191 = scmp.lt.s32.totalorder %s20, 1
      %s192 = scalar_select %p191, %s20, 1
      %p193 = scmp.lt.s32.totalorder %s190, 3
      %s194 = scalar_select %p193, %s190, 3
      %s195 = smul.addr %s192, 16
      %s196 = sadd.s32 %s194, %s195
      %s197 = smul.addr %s196, 8
      %s198 = scalar_lea.vmem %s0, %s197
      %p199 = pneg %p51
      %p200 = pneg %p48
      %p201 = pneg %p72
      %p202 = pneg %p69
      %p203 = pneg %p93
      %p204 = pneg %p90
      %p205 = pneg %p114
      %p206 = pneg %p111
      %p207 = pneg %p142
      %p208 = pneg %p139
      %s209 = smul.u32 4, %s21
      %p210 = scmp.lt.s32.totalorder %s20, 1
      %s211 = scalar_select %p210, %s20, 1
      %p212 = scmp.lt.s32.totalorder %s209, 3
      %s213 = scalar_select %p212, %s209, 3
      %s214 = smul.addr %s211, 4
      %s215 = sadd.s32 %s213, %s214
      %s216 = smul.addr %s215, 8
      %s217 = scalar_lea.vmem %s4, %s216
      %s218 = smul.u32 4, %s21
      %p219 = scmp.lt.s32.totalorder %s20, 1
      %s220 = scalar_select %p219, %s20, 1
      %p221 = scmp.lt.s32.totalorder %s218, 3
      %s222 = scalar_select %p221, %s218, 3
      %s223 = smul.addr %s220, 16
      %s224 = sadd.s32 %s222, %s223
      %s225 = smul.addr %s224, 8
      %s226 = scalar_lea.vmem %s0, %s225
      %s227 = smul.u32 4, %s21
      %s228 = smul.u32 4, %s21
      %p229 = scmp.lt.s32.totalorder %s20, 1
      %s230 = scalar_select %p229, %s20, 1
      %p231 = scmp.lt.s32.totalorder %s228, 3
      %s232 = scalar_select %p231, %s228, 3
      %s233 = smul.addr %s230, 4
      %s234 = sadd.s32 %s232, %s233
      %s235 = smul.addr %s234, 8
      %s236 = scalar_lea.vmem %s4, %s235
      %s237 = smul.u32 4, %s21
      %v238 = vld [vmem:[%s1] sm:$0xff]
      %v239 = vld [vmem:[%s2] sm:$0xff]
      %s240 = sld [smem:[#allocation2]]
      %242 = vset.pattern.permute.xlu0 0
      %243 = vperm.xlu0 %242, %v239
      %v244 = vpop.permute.xlu0 %243
      %v246 = vld [vmem:[%s226] ss:$8 sm:$0xf]
      %248 = vset.pattern.permute.xlu0 0
      %249 = vperm.xlu0 %248, %v238
      %v250 = vpop.permute.xlu0 %249
      %v253 = vlaneseq
      %v254 = vshrl.u32 %v253, 7
      %v255 = vsub.s32 0, %v254
      %v256 = vrot.slane %v246, %v255
      %v257 = vlaneseq
      %v258 = vshrl.u32 %v257, 7
      %v259 = vsub.s32 1, %v258
      %v260 = vrot.slane %v246, %v259
      %v261 = vlaneseq
      %v262 = vshrl.u32 %v261, 7
      %v263 = vsub.s32 2, %v262
      %v264 = vrot.slane %v246, %v263
      %v265 = vlaneseq
      %v266 = vshrl.u32 %v265, 7
      %v267 = vsub.s32 3, %v266
      %v268 = vrot.slane %v246, %v267
      %v273 = vmul.f32 %v250, %v256
      %v274 = vmul.f32 %v250, %v260
      %v275 = vmul.f32 %v250, %v264
      %v276 = vmul.f32 %v250, %v268
      %v277 = vadd.f32 %v244, %v273
      %v278 = vadd.f32 %v244, %v274
      %v279 = vadd.f32 %v244, %v275
      %v280 = vadd.f32 %v244, %v276
      %s281 = scalar_lea.vmem %s226, 1
      %v282 = vld [vmem:[%s281] ss:$8 sm:$0xf]
      %283 = vset.pattern.permute.xlu0 1
      %284 = vperm.xlu0 %283, %v238
      %v285 = vpop.permute.xlu0 %284
      %v288 = vlaneseq
      %v289 = vshrl.u32 %v288, 7
      %v290 = vsub.s32 0, %v289
      %v291 = vrot.slane %v282, %v290
      %v292 = vlaneseq
      %v293 = vshrl.u32 %v292, 7
      %v294 = vsub.s32 1, %v293
      %v295 = vrot.slane %v282, %v294
      %v296 = vlaneseq
      %v297 = vshrl.u32 %v296, 7
      %v298 = vsub.s32 2, %v297
      %v299 = vrot.slane %v282, %v298
      %v300 = vlaneseq
      %v301 = vshrl.u32 %v300, 7
      %v302 = vsub.s32 3, %v301
      %v303 = vrot.slane %v282, %v302
      %v308 = vmul.f32 %v285, %v291
      %v309 = vmul.f32 %v285, %v295
      %v310 = vmul.f32 %v285, %v299
      %v311 = vmul.f32 %v285, %v303
      %v312 = vadd.f32 %v277, %v308
      %v313 = vadd.f32 %v278, %v309
      %v314 = vadd.f32 %v279, %v310
      %v315 = vadd.f32 %v280, %v311
      %s316 = scalar_lea.vmem %s226, 2
      %v317 = vld [vmem:[%s316] ss:$8 sm:$0xf]
      %318 = vset.pattern.permute.xlu0 2
      %319 = vperm.xlu0 %318, %v238
      %v320 = vpop.permute.xlu0 %319
      %v323 = vlaneseq
      %v324 = vshrl.u32 %v323, 7
      %v325 = vsub.s32 0, %v324
      %v326 = vrot.slane %v317, %v325
      %v327 = vlaneseq
      %v328 = vshrl.u32 %v327, 7
      %v329 = vsub.s32 1, %v328
      %v330 = vrot.slane %v317, %v329
      %v331 = vlaneseq
      %v332 = vshrl.u32 %v331, 7
      %v333 = vsub.s32 2, %v332
      %v334 = vrot.slane %v317, %v333
      %v335 = vlaneseq
      %v336 = vshrl.u32 %v335, 7
      %v337 = vsub.s32 3, %v336
      %v338 = vrot.slane %v317, %v337
      %v343 = vmul.f32 %v320, %v326
      %v344 = vmul.f32 %v320, %v330
      %v345 = vmul.f32 %v320, %v334
      %v346 = vmul.f32 %v320, %v338
      %v347 = vadd.f32 %v312, %v343
      %v348 = vadd.f32 %v313, %v344
      %v349 = vadd.f32 %v314, %v345
      %v350 = vadd.f32 %v315, %v346
      %s351 = scalar_lea.vmem %s226, 3
      %v352 = vld [vmem:[%s351] ss:$8 sm:$0xf]
      %353 = vset.pattern.permute.xlu0 3
      %354 = vperm.xlu0 %353, %v238
      %v355 = vpop.permute.xlu0 %354
      %v358 = vlaneseq
      %v359 = vshrl.u32 %v358, 7
      %v360 = vsub.s32 0, %v359
      %v361 = vrot.slane %v352, %v360
      %v362 = vlaneseq
      %v363 = vshrl.u32 %v362, 7
      %v364 = vsub.s32 1, %v363
      %v365 = vrot.slane %v352, %v364
      %v366 = vlaneseq
      %v367 = vshrl.u32 %v366, 7
      %v368 = vsub.s32 2, %v367
      %v369 = vrot.slane %v352, %v368
      %v370 = vlaneseq
      %v371 = vshrl.u32 %v370, 7
      %v372 = vsub.s32 3, %v371
      %v373 = vrot.slane %v352, %v372
      %v378 = vmul.f32 %v355, %v361
      %v379 = vmul.f32 %v355, %v365
      %v380 = vmul.f32 %v355, %v369
      %v381 = vmul.f32 %v355, %v373
      %v382 = vadd.f32 %v347, %v378
      %v383 = vadd.f32 %v348, %v379
      %v384 = vadd.f32 %v349, %v380
      %v385 = vadd.f32 %v350, %v381
      %vm386 = vcmp.ge.f32.partialorder %v382, 0.0
      %vm387 = vcmp.ge.f32.partialorder %v383, 0.0
      %vm388 = vcmp.ge.f32.partialorder %v384, 0.0
      %vm389 = vcmp.ge.f32.partialorder %v385, 0.0
      %v390 = vstv %s240
      %v391 = vmul.f32 %v390, %v382
      %v392 = vmul.f32 %v390, %v383
      %v393 = vmul.f32 %v390, %v384
      %v394 = vmul.f32 %v390, %v385
      %v395 = vsel %vm386, %v382, %v391
      %v396 = vsel %vm387, %v383, %v392
      %v397 = vsel %vm388, %v384, %v393
      %v398 = vsel %vm389, %v385, %v394
      %s399 = scalar_lea.vmem %s226, 4
      %v400 = vld [vmem:[%s399] ss:$8 sm:$0xf]
      %v402 = vlaneseq
      %v403 = vshrl.u32 %v402, 7
      %v404 = vsub.s32 0, %v403
      %v405 = vrot.slane %v400, %v404
      %v406 = vlaneseq
      %v407 = vshrl.u32 %v406, 7
      %v408 = vsub.s32 1, %v407
      %v409 = vrot.slane %v400, %v408
      %v410 = vlaneseq
      %v411 = vshrl.u32 %v410, 7
      %v412 = vsub.s32 2, %v411
      %v413 = vrot.slane %v400, %v412
      %v414 = vlaneseq
      %v415 = vshrl.u32 %v414, 7
      %v416 = vsub.s32 3, %v415
      %v417 = vrot.slane %v400, %v416
      %v422 = vmul.f32 %v250, %v405
      %v423 = vmul.f32 %v250, %v409
      %v424 = vmul.f32 %v250, %v413
      %v425 = vmul.f32 %v250, %v417
      %v426 = vadd.f32 %v244, %v422
      %v427 = vadd.f32 %v244, %v423
      %v428 = vadd.f32 %v244, %v424
      %v429 = vadd.f32 %v244, %v425
      %s430 = scalar_lea.vmem %s226, 5
      %v431 = vld [vmem:[%s430] ss:$8 sm:$0xf]
      %v433 = vlaneseq
      %v434 = vshrl.u32 %v433, 7
      %v435 = vsub.s32 0, %v434
      %v436 = vrot.slane %v431, %v435
      %v437 = vlaneseq
      %v438 = vshrl.u32 %v437, 7
      %v439 = vsub.s32 1, %v438
      %v440 = vrot.slane %v431, %v439
      %v441 = vlaneseq
      %v442 = vshrl.u32 %v441, 7
      %v443 = vsub.s32 2, %v442
      %v444 = vrot.slane %v431, %v443
      %v445 = vlaneseq
      %v446 = vshrl.u32 %v445, 7
      %v447 = vsub.s32 3, %v446
      %v448 = vrot.slane %v431, %v447
      %v453 = vmul.f32 %v285, %v436
      %v454 = vmul.f32 %v285, %v440
      %v455 = vmul.f32 %v285, %v444
      %v456 = vmul.f32 %v285, %v448
      %v457 = vadd.f32 %v426, %v453
      %v458 = vadd.f32 %v427, %v454
      %v459 = vadd.f32 %v428, %v455
      %v460 = vadd.f32 %v429, %v456
      %s461 = scalar_lea.vmem %s226, 6
      %v462 = vld [vmem:[%s461] ss:$8 sm:$0xf]
      %v464 = vlaneseq
      %v465 = vshrl.u32 %v464, 7
      %v466 = vsub.s32 0, %v465
      %v467 = vrot.slane %v462, %v466
      %v468 = vlaneseq
      %v469 = vshrl.u32 %v468, 7
      %v470 = vsub.s32 1, %v469
      %v471 = vrot.slane %v462, %v470
      %v472 = vlaneseq
      %v473 = vshrl.u32 %v472, 7
      %v474 = vsub.s32 2, %v473
      %v475 = vrot.slane %v462, %v474
      %v476 = vlaneseq
      %v477 = vshrl.u32 %v476, 7
      %v478 = vsub.s32 3, %v477
      %v479 = vrot.slane %v462, %v478
      %v484 = vmul.f32 %v320, %v467
      %v485 = vmul.f32 %v320, %v471
      %v486 = vmul.f32 %v320, %v475
      %v487 = vmul.f32 %v320, %v479
      %v488 = vadd.f32 %v457, %v484
      %v489 = vadd.f32 %v458, %v485
      %v490 = vadd.f32 %v459, %v486
      %v491 = vadd.f32 %v460, %v487
      %s492 = scalar_lea.vmem %s226, 7
      %v493 = vld [vmem:[%s492] ss:$8 sm:$0xf]
      %v495 = vlaneseq
      %v496 = vshrl.u32 %v495, 7
      %v497 = vsub.s32 0, %v496
      %v498 = vrot.slane %v493, %v497
      %v499 = vlaneseq
      %v500 = vshrl.u32 %v499, 7
      %v501 = vsub.s32 1, %v500
      %v502 = vrot.slane %v493, %v501
      %v503 = vlaneseq
      %v504 = vshrl.u32 %v503, 7
      %v505 = vsub.s32 2, %v504
      %v506 = vrot.slane %v493, %v505
      %v507 = vlaneseq
      %v508 = vshrl.u32 %v507, 7
      %v509 = vsub.s32 3, %v508
      %v510 = vrot.slane %v493, %v509
      %v515 = vmul.f32 %v355, %v498
      %v516 = vmul.f32 %v355, %v502
      %v517 = vmul.f32 %v355, %v506
      %v518 = vmul.f32 %v355, %v510
      %v519 = vadd.f32 %v488, %v515
      %v520 = vadd.f32 %v489, %v516
      %v521 = vadd.f32 %v490, %v517
      %v522 = vadd.f32 %v491, %v518
      %vm523 = vcmp.ge.f32.partialorder %v519, 0.0
      %vm524 = vcmp.ge.f32.partialorder %v520, 0.0
      %vm525 = vcmp.ge.f32.partialorder %v521, 0.0
      %vm526 = vcmp.ge.f32.partialorder %v522, 0.0
      %v527 = vmul.f32 %v390, %v519
      %v528 = vmul.f32 %v390, %v520
      %v529 = vmul.f32 %v390, %v521
      %v530 = vmul.f32 %v390, %v522
      %v531 = vsel %vm523, %v519, %v527
      %v532 = vsel %vm524, %v520, %v528
      %v533 = vsel %vm525, %v521, %v529
      %v534 = vsel %vm526, %v522, %v530
      %v535 = vadd.f32 %v395, %v531
      %v536 = vadd.f32 %v396, %v532
      %v537 = vadd.f32 %v397, %v533
      %v538 = vadd.f32 %v398, %v534
      %s539 = scalar_lea.vmem %s226, 32
      %v540 = vld [vmem:[%s539] ss:$8 sm:$0xf]
      %v542 = vlaneseq
      %v543 = vshrl.u32 %v542, 7
      %v544 = vsub.s32 0, %v543
      %v545 = vrot.slane %v540, %v544
      %v546 = vlaneseq
      %v547 = vshrl.u32 %v546, 7
      %v548 = vsub.s32 1, %v547
      %v549 = vrot.slane %v540, %v548
      %v550 = vlaneseq
      %v551 = vshrl.u32 %v550, 7
      %v552 = vsub.s32 2, %v551
      %v553 = vrot.slane %v540, %v552
      %v554 = vlaneseq
      %v555 = vshrl.u32 %v554, 7
      %v556 = vsub.s32 3, %v555
      %v557 = vrot.slane %v540, %v556
      %v562 = vmul.f32 %v250, %v545
      %v563 = vmul.f32 %v250, %v549
      %v564 = vmul.f32 %v250, %v553
      %v565 = vmul.f32 %v250, %v557
      %v566 = vadd.f32 %v244, %v562
      %v567 = vadd.f32 %v244, %v563
      %v568 = vadd.f32 %v244, %v564
      %v569 = vadd.f32 %v244, %v565
      %s570 = scalar_lea.vmem %s226, 33
      %v571 = vld [vmem:[%s570] ss:$8 sm:$0xf]
      %v573 = vlaneseq
      %v574 = vshrl.u32 %v573, 7
      %v575 = vsub.s32 0, %v574
      %v576 = vrot.slane %v571, %v575
      %v577 = vlaneseq
      %v578 = vshrl.u32 %v577, 7
      %v579 = vsub.s32 1, %v578
      %v580 = vrot.slane %v571, %v579
      %v581 = vlaneseq
      %v582 = vshrl.u32 %v581, 7
      %v583 = vsub.s32 2, %v582
      %v584 = vrot.slane %v571, %v583
      %v585 = vlaneseq
      %v586 = vshrl.u32 %v585, 7
      %v587 = vsub.s32 3, %v586
      %v588 = vrot.slane %v571, %v587
      %v593 = vmul.f32 %v285, %v576
      %v594 = vmul.f32 %v285, %v580
      %v595 = vmul.f32 %v285, %v584
      %v596 = vmul.f32 %v285, %v588
      %v597 = vadd.f32 %v566, %v593
      %v598 = vadd.f32 %v567, %v594
      %v599 = vadd.f32 %v568, %v595
      %v600 = vadd.f32 %v569, %v596
      %s601 = scalar_lea.vmem %s226, 34
      %v602 = vld [vmem:[%s601] ss:$8 sm:$0xf]
      %v604 = vlaneseq
      %v605 = vshrl.u32 %v604, 7
      %v606 = vsub.s32 0, %v605
      %v607 = vrot.slane %v602, %v606
      %v608 = vlaneseq
      %v609 = vshrl.u32 %v608, 7
      %v610 = vsub.s32 1, %v609
      %v611 = vrot.slane %v602, %v610
      %v612 = vlaneseq
      %v613 = vshrl.u32 %v612, 7
      %v614 = vsub.s32 2, %v613
      %v615 = vrot.slane %v602, %v614
      %v616 = vlaneseq
      %v617 = vshrl.u32 %v616, 7
      %v618 = vsub.s32 3, %v617
      %v619 = vrot.slane %v602, %v618
      %v624 = vmul.f32 %v320, %v607
      %v625 = vmul.f32 %v320, %v611
      %v626 = vmul.f32 %v320, %v615
      %v627 = vmul.f32 %v320, %v619
      %v628 = vadd.f32 %v597, %v624
      %v629 = vadd.f32 %v598, %v625
      %v630 = vadd.f32 %v599, %v626
      %v631 = vadd.f32 %v600, %v627
      %s632 = scalar_lea.vmem %s226, 35
      %v633 = vld [vmem:[%s632] ss:$8 sm:$0xf]
      %v635 = vlaneseq
      %v636 = vshrl.u32 %v635, 7
      %v637 = vsub.s32 0, %v636
      %v638 = vrot.slane %v633, %v637
      %v639 = vlaneseq
      %v640 = vshrl.u32 %v639, 7
      %v641 = vsub.s32 1, %v640
      %v642 = vrot.slane %v633, %v641
      %v643 = vlaneseq
      %v644 = vshrl.u32 %v643, 7
      %v645 = vsub.s32 2, %v644
      %v646 = vrot.slane %v633, %v645
      %v647 = vlaneseq
      %v648 = vshrl.u32 %v647, 7
      %v649 = vsub.s32 3, %v648
      %v650 = vrot.slane %v633, %v649
      %v655 = vmul.f32 %v355, %v638
      %v656 = vmul.f32 %v355, %v642
      %v657 = vmul.f32 %v355, %v646
      %v658 = vmul.f32 %v355, %v650
      %v659 = vadd.f32 %v628, %v655
      %v660 = vadd.f32 %v629, %v656
      %v661 = vadd.f32 %v630, %v657
      %v662 = vadd.f32 %v631, %v658
      %vm663 = vcmp.ge.f32.partialorder %v659, 0.0
      %vm664 = vcmp.ge.f32.partialorder %v660, 0.0
      %vm665 = vcmp.ge.f32.partialorder %v661, 0.0
      %vm666 = vcmp.ge.f32.partialorder %v662, 0.0
      %v667 = vmul.f32 %v390, %v659
      %v668 = vmul.f32 %v390, %v660
      %v669 = vmul.f32 %v390, %v661
      %v670 = vmul.f32 %v390, %v662
      %v671 = vsel %vm663, %v659, %v667
      %v672 = vsel %vm664, %v660, %v668
      %v673 = vsel %vm665, %v661, %v669
      %v674 = vsel %vm666, %v662, %v670
      %v675 = vadd.f32 %v535, %v671
      %v676 = vadd.f32 %v536, %v672
      %v677 = vadd.f32 %v537, %v673
      %v678 = vadd.f32 %v538, %v674
      %s679 = scalar_lea.vmem %s226, 36
      %v680 = vld [vmem:[%s679] ss:$8 sm:$0xf]
      %v682 = vlaneseq
      %v683 = vshrl.u32 %v682, 7
      %v684 = vsub.s32 0, %v683
      %v685 = vrot.slane %v680, %v684
      %v686 = vlaneseq
      %v687 = vshrl.u32 %v686, 7
      %v688 = vsub.s32 1, %v687
      %v689 = vrot.slane %v680, %v688
      %v690 = vlaneseq
      %v691 = vshrl.u32 %v690, 7
      %v692 = vsub.s32 2, %v691
      %v693 = vrot.slane %v680, %v692
      %v694 = vlaneseq
      %v695 = vshrl.u32 %v694, 7
      %v696 = vsub.s32 3, %v695
      %v697 = vrot.slane %v680, %v696
      %v702 = vmul.f32 %v250, %v685
      %v703 = vmul.f32 %v250, %v689
      %v704 = vmul.f32 %v250, %v693
      %v705 = vmul.f32 %v250, %v697
      %v706 = vadd.f32 %v244, %v702
      %v707 = vadd.f32 %v244, %v703
      %v708 = vadd.f32 %v244, %v704
      %v709 = vadd.f32 %v244, %v705
      %s710 = scalar_lea.vmem %s226, 37
      %v711 = vld [vmem:[%s710] ss:$8 sm:$0xf]
      %v713 = vlaneseq
      %v714 = vshrl.u32 %v713, 7
      %v715 = vsub.s32 0, %v714
      %v716 = vrot.slane %v711, %v715
      %v717 = vlaneseq
      %v718 = vshrl.u32 %v717, 7
      %v719 = vsub.s32 1, %v718
      %v720 = vrot.slane %v711, %v719
      %v721 = vlaneseq
      %v722 = vshrl.u32 %v721, 7
      %v723 = vsub.s32 2, %v722
      %v724 = vrot.slane %v711, %v723
      %v725 = vlaneseq
      %v726 = vshrl.u32 %v725, 7
      %v727 = vsub.s32 3, %v726
      %v728 = vrot.slane %v711, %v727
      %v733 = vmul.f32 %v285, %v716
      %v734 = vmul.f32 %v285, %v720
      %v735 = vmul.f32 %v285, %v724
      %v736 = vmul.f32 %v285, %v728
      %v737 = vadd.f32 %v706, %v733
      %v738 = vadd.f32 %v707, %v734
      %v739 = vadd.f32 %v708, %v735
      %v740 = vadd.f32 %v709, %v736
      %s741 = scalar_lea.vmem %s226, 38
      %v742 = vld [vmem:[%s741] ss:$8 sm:$0xf]
      %v744 = vlaneseq
      %v745 = vshrl.u32 %v744, 7
      %v746 = vsub.s32 0, %v745
      %v747 = vrot.slane %v742, %v746
      %v748 = vlaneseq
      %v749 = vshrl.u32 %v748, 7
      %v750 = vsub.s32 1, %v749
      %v751 = vrot.slane %v742, %v750
      %v752 = vlaneseq
      %v753 = vshrl.u32 %v752, 7
      %v754 = vsub.s32 2, %v753
      %v755 = vrot.slane %v742, %v754
      %v756 = vlaneseq
      %v757 = vshrl.u32 %v756, 7
      %v758 = vsub.s32 3, %v757
      %v759 = vrot.slane %v742, %v758
      %v764 = vmul.f32 %v320, %v747
      %v765 = vmul.f32 %v320, %v751
      %v766 = vmul.f32 %v320, %v755
      %v767 = vmul.f32 %v320, %v759
      %v768 = vadd.f32 %v737, %v764
      %v769 = vadd.f32 %v738, %v765
      %v770 = vadd.f32 %v739, %v766
      %v771 = vadd.f32 %v740, %v767
      %s772 = scalar_lea.vmem %s226, 39
      %v773 = vld [vmem:[%s772] ss:$8 sm:$0xf]
      %v775 = vlaneseq
      %v776 = vshrl.u32 %v775, 7
      %v777 = vsub.s32 0, %v776
      %v778 = vrot.slane %v773, %v777
      %v779 = vlaneseq
      %v780 = vshrl.u32 %v779, 7
      %v781 = vsub.s32 1, %v780
      %v782 = vrot.slane %v773, %v781
      %v783 = vlaneseq
      %v784 = vshrl.u32 %v783, 7
      %v785 = vsub.s32 2, %v784
      %v786 = vrot.slane %v773, %v785
      %v787 = vlaneseq
      %v788 = vshrl.u32 %v787, 7
      %v789 = vsub.s32 3, %v788
      %v790 = vrot.slane %v773, %v789
      %v795 = vmul.f32 %v355, %v778
      %v796 = vmul.f32 %v355, %v782
      %v797 = vmul.f32 %v355, %v786
      %v798 = vmul.f32 %v355, %v790
      %v799 = vadd.f32 %v768, %v795
      %v800 = vadd.f32 %v769, %v796
      %v801 = vadd.f32 %v770, %v797
      %v802 = vadd.f32 %v771, %v798
      %vm803 = vcmp.ge.f32.partialorder %v799, 0.0
      %vm804 = vcmp.ge.f32.partialorder %v800, 0.0
      %vm805 = vcmp.ge.f32.partialorder %v801, 0.0
      %vm806 = vcmp.ge.f32.partialorder %v802, 0.0
      %v807 = vmul.f32 %v390, %v799
      %v808 = vmul.f32 %v390, %v800
      %v809 = vmul.f32 %v390, %v801
      %v810 = vmul.f32 %v390, %v802
      %v811 = vsel %vm803, %v799, %v807
      %v812 = vsel %vm804, %v800, %v808
      %v813 = vsel %vm805, %v801, %v809
      %v814 = vsel %vm806, %v802, %v810
      %v815 = vadd.f32 %v675, %v811
      %v816 = vadd.f32 %v676, %v812
      %v817 = vadd.f32 %v677, %v813
      %v818 = vadd.f32 %v678, %v814
      %s819 = scalar_lea.vmem %s226, 64
      %v820 = vld [vmem:[%s819] ss:$8 sm:$0xf]
      %v822 = vlaneseq
      %v823 = vshrl.u32 %v822, 7
      %v824 = vsub.s32 0, %v823
      %v825 = vrot.slane %v820, %v824
      %v826 = vlaneseq
      %v827 = vshrl.u32 %v826, 7
      %v828 = vsub.s32 1, %v827
      %v829 = vrot.slane %v820, %v828
      %v830 = vlaneseq
      %v831 = vshrl.u32 %v830, 7
      %v832 = vsub.s32 2, %v831
      %v833 = vrot.slane %v820, %v832
      %v834 = vlaneseq
      %v835 = vshrl.u32 %v834, 7
      %v836 = vsub.s32 3, %v835
      %v837 = vrot.slane %v820, %v836
      %v842 = vmul.f32 %v250, %v825
      %v843 = vmul.f32 %v250, %v829
      %v844 = vmul.f32 %v250, %v833
      %v845 = vmul.f32 %v250, %v837
      %v846 = vadd.f32 %v244, %v842
      %v847 = vadd.f32 %v244, %v843
      %v848 = vadd.f32 %v244, %v844
      %v849 = vadd.f32 %v244, %v845
      %s850 = scalar_lea.vmem %s226, 65
      %v851 = vld [vmem:[%s850] ss:$8 sm:$0xf]
      %v853 = vlaneseq
      %v854 = vshrl.u32 %v853, 7
      %v855 = vsub.s32 0, %v854
      %v856 = vrot.slane %v851, %v855
      %v857 = vlaneseq
      %v858 = vshrl.u32 %v857, 7
      %v859 = vsub.s32 1, %v858
      %v860 = vrot.slane %v851, %v859
      %v861 = vlaneseq
      %v862 = vshrl.u32 %v861, 7
      %v863 = vsub.s32 2, %v862
      %v864 = vrot.slane %v851, %v863
      %v865 = vlaneseq
      %v866 = vshrl.u32 %v865, 7
      %v867 = vsub.s32 3, %v866
      %v868 = vrot.slane %v851, %v867
      %v873 = vmul.f32 %v285, %v856
      %v874 = vmul.f32 %v285, %v860
      %v875 = vmul.f32 %v285, %v864
      %v876 = vmul.f32 %v285, %v868
      %v877 = vadd.f32 %v846, %v873
      %v878 = vadd.f32 %v847, %v874
      %v879 = vadd.f32 %v848, %v875
      %v880 = vadd.f32 %v849, %v876
      %s881 = scalar_lea.vmem %s226, 66
      %v882 = vld [vmem:[%s881] ss:$8 sm:$0xf]
      %v884 = vlaneseq
      %v885 = vshrl.u32 %v884, 7
      %v886 = vsub.s32 0, %v885
      %v887 = vrot.slane %v882, %v886
      %v888 = vlaneseq
      %v889 = vshrl.u32 %v888, 7
      %v890 = vsub.s32 1, %v889
      %v891 = vrot.slane %v882, %v890
      %v892 = vlaneseq
      %v893 = vshrl.u32 %v892, 7
      %v894 = vsub.s32 2, %v893
      %v895 = vrot.slane %v882, %v894
      %v896 = vlaneseq
      %v897 = vshrl.u32 %v896, 7
      %v898 = vsub.s32 3, %v897
      %v899 = vrot.slane %v882, %v898
      %v904 = vmul.f32 %v320, %v887
      %v905 = vmul.f32 %v320, %v891
      %v906 = vmul.f32 %v320, %v895
      %v907 = vmul.f32 %v320, %v899
      %v908 = vadd.f32 %v877, %v904
      %v909 = vadd.f32 %v878, %v905
      %v910 = vadd.f32 %v879, %v906
      %v911 = vadd.f32 %v880, %v907
      %s912 = scalar_lea.vmem %s226, 67
      %v913 = vld [vmem:[%s912] ss:$8 sm:$0xf]
      %v915 = vlaneseq
      %v916 = vshrl.u32 %v915, 7
      %v917 = vsub.s32 0, %v916
      %v918 = vrot.slane %v913, %v917
      %v919 = vlaneseq
      %v920 = vshrl.u32 %v919, 7
      %v921 = vsub.s32 1, %v920
      %v922 = vrot.slane %v913, %v921
      %v923 = vlaneseq
      %v924 = vshrl.u32 %v923, 7
      %v925 = vsub.s32 2, %v924
      %v926 = vrot.slane %v913, %v925
      %v927 = vlaneseq
      %v928 = vshrl.u32 %v927, 7
      %v929 = vsub.s32 3, %v928
      %v930 = vrot.slane %v913, %v929
      %v935 = vmul.f32 %v355, %v918
      %v936 = vmul.f32 %v355, %v922
      %v937 = vmul.f32 %v355, %v926
      %v938 = vmul.f32 %v355, %v930
      %v939 = vadd.f32 %v908, %v935
      %v940 = vadd.f32 %v909, %v936
      %v941 = vadd.f32 %v910, %v937
      %v942 = vadd.f32 %v911, %v938
      %vm943 = vcmp.ge.f32.partialorder %v939, 0.0
      %vm944 = vcmp.ge.f32.partialorder %v940, 0.0
      %vm945 = vcmp.ge.f32.partialorder %v941, 0.0
      %vm946 = vcmp.ge.f32.partialorder %v942, 0.0
      %v947 = vmul.f32 %v390, %v939
      %v948 = vmul.f32 %v390, %v940
      %v949 = vmul.f32 %v390, %v941
      %v950 = vmul.f32 %v390, %v942
      %v951 = vsel %vm943, %v939, %v947
      %v952 = vsel %vm944, %v940, %v948
      %v953 = vsel %vm945, %v941, %v949
      %v954 = vsel %vm946, %v942, %v950
      %v955 = vadd.f32 %v815, %v951
      %v956 = vadd.f32 %v816, %v952
      %v957 = vadd.f32 %v817, %v953
      %v958 = vadd.f32 %v818, %v954
      %s959 = scalar_lea.vmem %s226, 68
      %v960 = vld [vmem:[%s959] ss:$8 sm:$0xf]
      %v962 = vlaneseq
      %v963 = vshrl.u32 %v962, 7
      %v964 = vsub.s32 0, %v963
      %v965 = vrot.slane %v960, %v964
      %v966 = vlaneseq
      %v967 = vshrl.u32 %v966, 7
      %v968 = vsub.s32 1, %v967
      %v969 = vrot.slane %v960, %v968
      %v970 = vlaneseq
      %v971 = vshrl.u32 %v970, 7
      %v972 = vsub.s32 2, %v971
      %v973 = vrot.slane %v960, %v972
      %v974 = vlaneseq
      %v975 = vshrl.u32 %v974, 7
      %v976 = vsub.s32 3, %v975
      %v977 = vrot.slane %v960, %v976
      %v982 = vmul.f32 %v250, %v965
      %v983 = vmul.f32 %v250, %v969
      %v984 = vmul.f32 %v250, %v973
      %v985 = vmul.f32 %v250, %v977
      %v986 = vadd.f32 %v244, %v982
      %v987 = vadd.f32 %v244, %v983
      %v988 = vadd.f32 %v244, %v984
      %v989 = vadd.f32 %v244, %v985
      %s990 = scalar_lea.vmem %s226, 69
      %v991 = vld [vmem:[%s990] ss:$8 sm:$0xf]
      %v993 = vlaneseq
      %v994 = vshrl.u32 %v993, 7
      %v995 = vsub.s32 0, %v994
      %v996 = vrot.slane %v991, %v995
      %v997 = vlaneseq
      %v998 = vshrl.u32 %v997, 7
      %v999 = vsub.s32 1, %v998
      %v1000 = vrot.slane %v991, %v999
      %v1001 = vlaneseq
      %v1002 = vshrl.u32 %v1001, 7
      %v1003 = vsub.s32 2, %v1002
      %v1004 = vrot.slane %v991, %v1003
      %v1005 = vlaneseq
      %v1006 = vshrl.u32 %v1005, 7
      %v1007 = vsub.s32 3, %v1006
      %v1008 = vrot.slane %v991, %v1007
      %v1013 = vmul.f32 %v285, %v996
      %v1014 = vmul.f32 %v285, %v1000
      %v1015 = vmul.f32 %v285, %v1004
      %v1016 = vmul.f32 %v285, %v1008
      %v1017 = vadd.f32 %v986, %v1013
      %v1018 = vadd.f32 %v987, %v1014
      %v1019 = vadd.f32 %v988, %v1015
      %v1020 = vadd.f32 %v989, %v1016
      %s1021 = scalar_lea.vmem %s226, 70
      %v1022 = vld [vmem:[%s1021] ss:$8 sm:$0xf]
      %v1024 = vlaneseq
      %v1025 = vshrl.u32 %v1024, 7
      %v1026 = vsub.s32 0, %v1025
      %v1027 = vrot.slane %v1022, %v1026
      %v1028 = vlaneseq
      %v1029 = vshrl.u32 %v1028, 7
      %v1030 = vsub.s32 1, %v1029
      %v1031 = vrot.slane %v1022, %v1030
      %v1032 = vlaneseq
      %v1033 = vshrl.u32 %v1032, 7
      %v1034 = vsub.s32 2, %v1033
      %v1035 = vrot.slane %v1022, %v1034
      %v1036 = vlaneseq
      %v1037 = vshrl.u32 %v1036, 7
      %v1038 = vsub.s32 3, %v1037
      %v1039 = vrot.slane %v1022, %v1038
      %v1044 = vmul.f32 %v320, %v1027
      %v1045 = vmul.f32 %v320, %v1031
      %v1046 = vmul.f32 %v320, %v1035
      %v1047 = vmul.f32 %v320, %v1039
      %v1048 = vadd.f32 %v1017, %v1044
      %v1049 = vadd.f32 %v1018, %v1045
      %v1050 = vadd.f32 %v1019, %v1046
      %v1051 = vadd.f32 %v1020, %v1047
      %s1052 = scalar_lea.vmem %s226, 71
      %v1053 = vld [vmem:[%s1052] ss:$8 sm:$0xf]
      %v1055 = vlaneseq
      %v1056 = vshrl.u32 %v1055, 7
      %v1057 = vsub.s32 0, %v1056
      %v1058 = vrot.slane %v1053, %v1057
      %v1059 = vlaneseq
      %v1060 = vshrl.u32 %v1059, 7
      %v1061 = vsub.s32 1, %v1060
      %v1062 = vrot.slane %v1053, %v1061
      %v1063 = vlaneseq
      %v1064 = vshrl.u32 %v1063, 7
      %v1065 = vsub.s32 2, %v1064
      %v1066 = vrot.slane %v1053, %v1065
      %v1067 = vlaneseq
      %v1068 = vshrl.u32 %v1067, 7
      %v1069 = vsub.s32 3, %v1068
      %v1070 = vrot.slane %v1053, %v1069
      %v1075 = vmul.f32 %v355, %v1058
      %v1076 = vmul.f32 %v355, %v1062
      %v1077 = vmul.f32 %v355, %v1066
      %v1078 = vmul.f32 %v355, %v1070
      %v1079 = vadd.f32 %v1048, %v1075
      %v1080 = vadd.f32 %v1049, %v1076
      %v1081 = vadd.f32 %v1050, %v1077
      %v1082 = vadd.f32 %v1051, %v1078
      %vm1083 = vcmp.ge.f32.partialorder %v1079, 0.0
      %vm1084 = vcmp.ge.f32.partialorder %v1080, 0.0
      %vm1085 = vcmp.ge.f32.partialorder %v1081, 0.0
      %vm1086 = vcmp.ge.f32.partialorder %v1082, 0.0
      %v1087 = vmul.f32 %v390, %v1079
      %v1088 = vmul.f32 %v390, %v1080
      %v1089 = vmul.f32 %v390, %v1081
      %v1090 = vmul.f32 %v390, %v1082
      %v1091 = vsel %vm1083, %v1079, %v1087
      %v1092 = vsel %vm1084, %v1080, %v1088
      %v1093 = vsel %vm1085, %v1081, %v1089
      %v1094 = vsel %vm1086, %v1082, %v1090
      %v1095 = vadd.f32 %v955, %v1091
      %v1096 = vadd.f32 %v956, %v1092
      %v1097 = vadd.f32 %v957, %v1093
      %v1098 = vadd.f32 %v958, %v1094
      %s1099 = scalar_lea.vmem %s226, 96
      %v1100 = vld [vmem:[%s1099] ss:$8 sm:$0xf]
      %v1102 = vlaneseq
      %v1103 = vshrl.u32 %v1102, 7
      %v1104 = vsub.s32 0, %v1103
      %v1105 = vrot.slane %v1100, %v1104
      %v1106 = vlaneseq
      %v1107 = vshrl.u32 %v1106, 7
      %v1108 = vsub.s32 1, %v1107
      %v1109 = vrot.slane %v1100, %v1108
      %v1110 = vlaneseq
      %v1111 = vshrl.u32 %v1110, 7
      %v1112 = vsub.s32 2, %v1111
      %v1113 = vrot.slane %v1100, %v1112
      %v1114 = vlaneseq
      %v1115 = vshrl.u32 %v1114, 7
      %v1116 = vsub.s32 3, %v1115
      %v1117 = vrot.slane %v1100, %v1116
      %v1122 = vmul.f32 %v250, %v1105
      %v1123 = vmul.f32 %v250, %v1109
      %v1124 = vmul.f32 %v250, %v1113
      %v1125 = vmul.f32 %v250, %v1117
      %v1126 = vadd.f32 %v244, %v1122
      %v1127 = vadd.f32 %v244, %v1123
      %v1128 = vadd.f32 %v244, %v1124
      %v1129 = vadd.f32 %v244, %v1125
      %s1130 = scalar_lea.vmem %s226, 97
      %v1131 = vld [vmem:[%s1130] ss:$8 sm:$0xf]
      %v1133 = vlaneseq
      %v1134 = vshrl.u32 %v1133, 7
      %v1135 = vsub.s32 0, %v1134
      %v1136 = vrot.slane %v1131, %v1135
      %v1137 = vlaneseq
      %v1138 = vshrl.u32 %v1137, 7
      %v1139 = vsub.s32 1, %v1138
      %v1140 = vrot.slane %v1131, %v1139
      %v1141 = vlaneseq
      %v1142 = vshrl.u32 %v1141, 7
      %v1143 = vsub.s32 2, %v1142
      %v1144 = vrot.slane %v1131, %v1143
      %v1145 = vlaneseq
      %v1146 = vshrl.u32 %v1145, 7
      %v1147 = vsub.s32 3, %v1146
      %v1148 = vrot.slane %v1131, %v1147
      %v1153 = vmul.f32 %v285, %v1136
      %v1154 = vmul.f32 %v285, %v1140
      %v1155 = vmul.f32 %v285, %v1144
      %v1156 = vmul.f32 %v285, %v1148
      %v1157 = vadd.f32 %v1126, %v1153
      %v1158 = vadd.f32 %v1127, %v1154
      %v1159 = vadd.f32 %v1128, %v1155
      %v1160 = vadd.f32 %v1129, %v1156
      %s1161 = scalar_lea.vmem %s226, 98
      %v1162 = vld [vmem:[%s1161] ss:$8 sm:$0xf]
      %v1164 = vlaneseq
      %v1165 = vshrl.u32 %v1164, 7
      %v1166 = vsub.s32 0, %v1165
      %v1167 = vrot.slane %v1162, %v1166
      %v1168 = vlaneseq
      %v1169 = vshrl.u32 %v1168, 7
      %v1170 = vsub.s32 1, %v1169
      %v1171 = vrot.slane %v1162, %v1170
      %v1172 = vlaneseq
      %v1173 = vshrl.u32 %v1172, 7
      %v1174 = vsub.s32 2, %v1173
      %v1175 = vrot.slane %v1162, %v1174
      %v1176 = vlaneseq
      %v1177 = vshrl.u32 %v1176, 7
      %v1178 = vsub.s32 3, %v1177
      %v1179 = vrot.slane %v1162, %v1178
      %v1184 = vmul.f32 %v320, %v1167
      %v1185 = vmul.f32 %v320, %v1171
      %v1186 = vmul.f32 %v320, %v1175
      %v1187 = vmul.f32 %v320, %v1179
      %v1188 = vadd.f32 %v1157, %v1184
      %v1189 = vadd.f32 %v1158, %v1185
      %v1190 = vadd.f32 %v1159, %v1186
      %v1191 = vadd.f32 %v1160, %v1187
      %s1192 = scalar_lea.vmem %s226, 99
      %v1193 = vld [vmem:[%s1192] ss:$8 sm:$0xf]
      %v1195 = vlaneseq
      %v1196 = vshrl.u32 %v1195, 7
      %v1197 = vsub.s32 0, %v1196
      %v1198 = vrot.slane %v1193, %v1197
      %v1199 = vlaneseq
      %v1200 = vshrl.u32 %v1199, 7
      %v1201 = vsub.s32 1, %v1200
      %v1202 = vrot.slane %v1193, %v1201
      %v1203 = vlaneseq
      %v1204 = vshrl.u32 %v1203, 7
      %v1205 = vsub.s32 2, %v1204
      %v1206 = vrot.slane %v1193, %v1205
      %v1207 = vlaneseq
      %v1208 = vshrl.u32 %v1207, 7
      %v1209 = vsub.s32 3, %v1208
      %v1210 = vrot.slane %v1193, %v1209
      %v1215 = vmul.f32 %v355, %v1198
      %v1216 = vmul.f32 %v355, %v1202
      %v1217 = vmul.f32 %v355, %v1206
      %v1218 = vmul.f32 %v355, %v1210
      %v1219 = vadd.f32 %v1188, %v1215
      %v1220 = vadd.f32 %v1189, %v1216
      %v1221 = vadd.f32 %v1190, %v1217
      %v1222 = vadd.f32 %v1191, %v1218
      %vm1223 = vcmp.ge.f32.partialorder %v1219, 0.0
      %vm1224 = vcmp.ge.f32.partialorder %v1220, 0.0
      %vm1225 = vcmp.ge.f32.partialorder %v1221, 0.0
      %vm1226 = vcmp.ge.f32.partialorder %v1222, 0.0
      %v1227 = vmul.f32 %v390, %v1219
      %v1228 = vmul.f32 %v390, %v1220
      %v1229 = vmul.f32 %v390, %v1221
      %v1230 = vmul.f32 %v390, %v1222
      %v1231 = vsel %vm1223, %v1219, %v1227
      %v1232 = vsel %vm1224, %v1220, %v1228
      %v1233 = vsel %vm1225, %v1221, %v1229
      %v1234 = vsel %vm1226, %v1222, %v1230
      %v1235 = vadd.f32 %v1095, %v1231
      %v1236 = vadd.f32 %v1096, %v1232
      %v1237 = vadd.f32 %v1097, %v1233
      %v1238 = vadd.f32 %v1098, %v1234
      %s1239 = scalar_lea.vmem %s226, 100
      %v1240 = vld [vmem:[%s1239] ss:$8 sm:$0xf]
      %v1242 = vlaneseq
      %v1243 = vshrl.u32 %v1242, 7
      %v1244 = vsub.s32 0, %v1243
      %v1245 = vrot.slane %v1240, %v1244
      %v1246 = vlaneseq
      %v1247 = vshrl.u32 %v1246, 7
      %v1248 = vsub.s32 1, %v1247
      %v1249 = vrot.slane %v1240, %v1248
      %v1250 = vlaneseq
      %v1251 = vshrl.u32 %v1250, 7
      %v1252 = vsub.s32 2, %v1251
      %v1253 = vrot.slane %v1240, %v1252
      %v1254 = vlaneseq
      %v1255 = vshrl.u32 %v1254, 7
      %v1256 = vsub.s32 3, %v1255
      %v1257 = vrot.slane %v1240, %v1256
      %v1262 = vmul.f32 %v250, %v1245
      %v1263 = vmul.f32 %v250, %v1249
      %v1264 = vmul.f32 %v250, %v1253
      %v1265 = vmul.f32 %v250, %v1257
      %v1266 = vadd.f32 %v244, %v1262
      %v1267 = vadd.f32 %v244, %v1263
      %v1268 = vadd.f32 %v244, %v1264
      %v1269 = vadd.f32 %v244, %v1265
      %s1270 = scalar_lea.vmem %s226, 101
      %v1271 = vld [vmem:[%s1270] ss:$8 sm:$0xf]
      %v1273 = vlaneseq
      %v1274 = vshrl.u32 %v1273, 7
      %v1275 = vsub.s32 0, %v1274
      %v1276 = vrot.slane %v1271, %v1275
      %v1277 = vlaneseq
      %v1278 = vshrl.u32 %v1277, 7
      %v1279 = vsub.s32 1, %v1278
      %v1280 = vrot.slane %v1271, %v1279
      %v1281 = vlaneseq
      %v1282 = vshrl.u32 %v1281, 7
      %v1283 = vsub.s32 2, %v1282
      %v1284 = vrot.slane %v1271, %v1283
      %v1285 = vlaneseq
      %v1286 = vshrl.u32 %v1285, 7
      %v1287 = vsub.s32 3, %v1286
      %v1288 = vrot.slane %v1271, %v1287
      %v1293 = vmul.f32 %v285, %v1276
      %v1294 = vmul.f32 %v285, %v1280
      %v1295 = vmul.f32 %v285, %v1284
      %v1296 = vmul.f32 %v285, %v1288
      %v1297 = vadd.f32 %v1266, %v1293
      %v1298 = vadd.f32 %v1267, %v1294
      %v1299 = vadd.f32 %v1268, %v1295
      %v1300 = vadd.f32 %v1269, %v1296
      %s1301 = scalar_lea.vmem %s226, 102
      %v1302 = vld [vmem:[%s1301] ss:$8 sm:$0xf]
      %v1304 = vlaneseq
      %v1305 = vshrl.u32 %v1304, 7
      %v1306 = vsub.s32 0, %v1305
      %v1307 = vrot.slane %v1302, %v1306
      %v1308 = vlaneseq
      %v1309 = vshrl.u32 %v1308, 7
      %v1310 = vsub.s32 1, %v1309
      %v1311 = vrot.slane %v1302, %v1310
      %v1312 = vlaneseq
      %v1313 = vshrl.u32 %v1312, 7
      %v1314 = vsub.s32 2, %v1313
      %v1315 = vrot.slane %v1302, %v1314
      %v1316 = vlaneseq
      %v1317 = vshrl.u32 %v1316, 7
      %v1318 = vsub.s32 3, %v1317
      %v1319 = vrot.slane %v1302, %v1318
      %v1324 = vmul.f32 %v320, %v1307
      %v1325 = vmul.f32 %v320, %v1311
      %v1326 = vmul.f32 %v320, %v1315
      %v1327 = vmul.f32 %v320, %v1319
      %v1328 = vadd.f32 %v1297, %v1324
      %v1329 = vadd.f32 %v1298, %v1325
      %v1330 = vadd.f32 %v1299, %v1326
      %v1331 = vadd.f32 %v1300, %v1327
      %s1332 = scalar_lea.vmem %s226, 103
      %v1333 = vld [vmem:[%s1332] ss:$8 sm:$0xf]
      %v1335 = vlaneseq
      %v1336 = vshrl.u32 %v1335, 7
      %v1337 = vsub.s32 0, %v1336
      %v1338 = vrot.slane %v1333, %v1337
      %v1339 = vlaneseq
      %v1340 = vshrl.u32 %v1339, 7
      %v1341 = vsub.s32 1, %v1340
      %v1342 = vrot.slane %v1333, %v1341
      %v1343 = vlaneseq
      %v1344 = vshrl.u32 %v1343, 7
      %v1345 = vsub.s32 2, %v1344
      %v1346 = vrot.slane %v1333, %v1345
      %v1347 = vlaneseq
      %v1348 = vshrl.u32 %v1347, 7
      %v1349 = vsub.s32 3, %v1348
      %v1350 = vrot.slane %v1333, %v1349
      %v1355 = vmul.f32 %v355, %v1338
      %v1356 = vmul.f32 %v355, %v1342
      %v1357 = vmul.f32 %v355, %v1346
      %v1358 = vmul.f32 %v355, %v1350
      %v1359 = vadd.f32 %v1328, %v1355
      %v1360 = vadd.f32 %v1329, %v1356
      %v1361 = vadd.f32 %v1330, %v1357
      %v1362 = vadd.f32 %v1331, %v1358
      %vm1363 = vcmp.ge.f32.partialorder %v1359, 0.0
      %vm1364 = vcmp.ge.f32.partialorder %v1360, 0.0
      %vm1365 = vcmp.ge.f32.partialorder %v1361, 0.0
      %vm1366 = vcmp.ge.f32.partialorder %v1362, 0.0
      %v1367 = vmul.f32 %v390, %v1359
      %v1368 = vmul.f32 %v390, %v1360
      %v1369 = vmul.f32 %v390, %v1361
      %v1370 = vmul.f32 %v390, %v1362
      %v1371 = vsel %vm1363, %v1359, %v1367
      %v1372 = vsel %vm1364, %v1360, %v1368
      %v1373 = vsel %vm1365, %v1361, %v1369
      %v1374 = vsel %vm1366, %v1362, %v1370
      %v1375 = vadd.f32 %v1235, %v1371
      %v1376 = vadd.f32 %v1236, %v1372
      %v1377 = vadd.f32 %v1237, %v1373
      %v1378 = vadd.f32 %v1238, %v1374
      %1379 = vst [vmem:[%s236] sm:$0xff] %v1375
      %1380 = vst [vmem:[%s236 + $0x8] sm:$0xff] %v1376
      %1381 = vst [vmem:[%s236 + $0x10] sm:$0xff] %v1377
      %1382 = vst [vmem:[%s236 + $0x18] sm:$0xff] %v1378
      %s1383 = smul.u32 4, %s21
      %p1384 = scmp.lt.s32.totalorder %s20, 1
      %s1385 = scalar_select %p1384, %s20, 1
      %p1386 = scmp.lt.s32.totalorder %s1383, 3
      %s1387 = scalar_select %p1386, %s1383, 3
      %s1388 = smul.addr %s1385, 4
      %s1389 = sadd.s32 %s1387, %s1388
      %s1390 = smul.addr %s1389, 8
      %s1391 = scalar_lea.vmem %s4, %s1390
      // Predicated region
      $region37: #{covolution_with_pooling.1} parent=35 // pred_check
        %p1392 = pneg %p139
      $region38: #{covolution_with_pooling.1} parent=35 // pred_check_branch
        %1394 = sbr.rel (%p1392) target = $region40
      $region39: #{covolution_with_pooling.1} parent=35 // pred_region
        %s1395 = smul.u32 4, %s21
      $region40: #{covolution_with_pooling.1} parent=35 // pred_fallthru
        _
    $region36: #{covolution_with_pooling.1} parent=5 // pred_fallthru
      _
    %p1396 = scmp.le.s32.totalorder 2, %s11
    // Predicated region
    $region41: #{covolution_with_pooling.1} parent=5 // pred_check
      %p1397 = pneg %p1396
    $region42: #{covolution_with_pooling.1} parent=5 // pred_check_branch
      %1399 = sbr.rel (%p1397) target = $region44
    $region43: #{covolution_with_pooling.1} parent=5 // pred_region
      %s1400 = ssub.s32 %s11, 2
      // Predicated region
      $region45: #{covolution_with_pooling.1} parent=43 // pred_check
        %p1401 = pneg %p145
      $region46: #{covolution_with_pooling.1} parent=43 // pred_check_branch
        %1403 = sbr.rel (%p1401) target = $region48
      $region47: #{covolution_with_pooling.1} parent=43 // pred_region
        %s1404 = smul.u32 4, %s23
        %p1405 = scmp.lt.s32.totalorder %s22, 1
        %s1406 = scalar_select %p1405, %s22, 1
        %p1407 = scmp.lt.s32.totalorder %s1404, 3
        %s1408 = scalar_select %p1407, %s1404, 3
        %s1409 = smul.addr %s1406, 4
        %s1410 = sadd.s32 %s1408, %s1409
        %s1411 = smul.addr %s1410, 8
        %s1412 = scalar_lea.vmem %s4, %s1411
      $region48: #{covolution_with_pooling.1} parent=43 // pred_fallthru
        _
    $region44: #{covolution_with_pooling.1} parent=5 // pred_fallthru
      _
  $region6: #{covolution_with_pooling.1} parent=0 // loop_footer
    %s15 = sadd.s32 1, %s11
  $region7: #{covolution_with_pooling.1} parent=0 // loop_footer_branch
    %10 = sbr.rel target = $region3
  $region8: #{covolution_with_pooling.1} parent=0 // loop_exit
    _

</llo_original>
